<compile_context>
chip_gen: v6e
topology: v6e:2x2x1
jax: 0.10.0
libtpu: 0.0.40
codegen_flags: <defaults>
</compile_context>

<pallas_src>
import functools

import jax
import jax.numpy as jnp
from jax.experimental import pallas as pl
from jax.experimental.pallas import tpu as pltpu


def _round_up(x, m):
    return (x + m - 1) // m * m


def _vmem_limit(block_bytes):
    """Per-call VMEM cap: 2x the estimated working set + margin, <= 32 MiB."""
    return int(min(max(2 * block_bytes + (4 << 20), 8 << 20), 32 << 20))


# ----------------------------------------------------------------------------
# Pallas kernels
# ----------------------------------------------------------------------------
def conv_mm_kernel(p_ref, w_ref, scale_ref, shift_ref, o_ref):
    """Fused im2col-matmul + folded (conv bias + BatchNorm) affine + ReLU.

    p_ref:     (TM, K)   bf16 im2col patch rows (batch*space flattened into M)
    w_ref:     (K, Cp)   bf16 reshaped conv weight (lane-dense, zero padded)
    scale_ref: (1, Cp)   f32  gamma / sqrt(var + eps)          (0 in pad cols)
    shift_ref: (1, Cp)   f32  beta + (conv_bias - mean)*scale  (0 in pad cols,
                               1.0 in the conv2 counter lane)
    o_ref:     (TM, Cp)
    """
    y = jnp.dot(p_ref[...], w_ref[...], preferred_element_type=jnp.float32)
    y = y * scale_ref[...] + shift_ref[...]
    o_ref[...] = jnp.maximum(y, 0.0).astype(o_ref.dtype)


def conv_bn_relu(patches, w_mat, scale, shift, out_dtype, tm_target=1024):
    """patches: (M, K) bf16 -> (M, Cp) out_dtype.  Grid tiles M; weights resident."""
    M, K = patches.shape
    Cp = w_mat.shape[1]
    # Single full-dim block when M is small; otherwise large 16-aligned tiles.
    tm = tm_target if M > tm_target else M
    grid_m = pl.cdiv(M, tm)
    out_isz = jnp.dtype(out_dtype).itemsize
    blk = (2 * (tm * K * patches.dtype.itemsize + tm * Cp * out_isz)
           + 2 * K * Cp * w_mat.dtype.itemsize + 4 * Cp * 4)
    return pl.pallas_call(
        conv_mm_kernel,
        out_shape=jax.ShapeDtypeStruct((M, Cp), out_dtype),
        grid=(grid_m,),
        in_specs=[
            pl.BlockSpec((tm, K), lambda m: (m, 0)),
            pl.BlockSpec((K, Cp), lambda m: (0, 0)),
            pl.BlockSpec((1, Cp), lambda m: (0, 0)),
            pl.BlockSpec((1, Cp), lambda m: (0, 0)),
        ],
        out_specs=pl.BlockSpec((tm, Cp), lambda m: (m, 0)),
        compiler_params=pltpu.CompilerParams(
            dimension_semantics=("parallel",),
            vmem_limit_bytes=_vmem_limit(blk)),
    )(patches, w_mat, scale, shift)


def agg_kernel(feat_ref, seg_ref, pos_ref, o_ref, acc_ref, *,
               count_col, n_total, tn):
    """N-tiled scatter_mean over segments + precomputed positional embedding.

    feat_ref: (1, tn, Dp) bf16  feature tile; lane `count_col` holds 1.0
    seg_ref:  (1, 1, tn)  int32 segment id per spatial location
    pos_ref:  (1, Sp, Dp) f32   precomputed (masked) positional embedding
    o_ref:    (1, Sp, Dp) f32   output (written on the last N step only)
    acc_ref:  (Sp, Dp)    f32   VMEM scratch: per-segment sums (+ counts)
    """
    nk = pl.program_id(1)

    @pl.when(nk == 0)
    def _():
        acc_ref[...] = jnp.zeros_like(acc_ref)

    feat = feat_ref[0]                                       # (tn, Dp) bf16
    seg = seg_ref[0]                                         # (1, tn) int32
    S = acc_ref.shape[0]

    if n_total % tn != 0:
        # Partial last tile: zero out-of-range rows so stale VMEM contents
        # (possibly NaN bit patterns) can never reach the MXU accumulation.
        col = jax.lax.broadcasted_iota(jnp.int32, (tn, 1), 0) + nk * tn
        feat = jnp.where(col < n_total, feat, jnp.zeros_like(feat))

    row_id = jax.lax.broadcasted_iota(jnp.int32, (S, tn), 0)
    onehot = (row_id == seg).astype(jnp.bfloat16)            # (S, tn)
    # One MXU matmul yields per-segment feature sums AND counts (the "ones"
    # lane written by conv2's epilogue).
    acc_ref[...] += jnp.dot(onehot, feat, preferred_element_type=jnp.float32)

    @pl.when(nk == pl.num_programs(1) - 1)
    def _():
        sums = acc_ref[...]
        counts = sums[:, count_col:count_col + 1]            # (S, 1)
        inv = pl.reciprocal(jnp.maximum(counts, 1.0), approx=True)
        o_ref[0] = sums * inv + pos_ref[0]                   # mean + pos embed


def segment_mean_plus_pos(feat, seg_flat, pos, count_col, tn_target=512):
    """feat (B, N, Dp) bf16, seg (B, 1, N) i32, pos (B, Sp, Dp) f32 -> (B, Sp, Dp)."""
    B, N, Dp = feat.shape
    Sp = pos.shape[1]
    if N <= 128:
        tn = N                               # single (full-dim) block
    else:
        tn = min(tn_target, (N // 128) * 128)
    n_blocks = pl.cdiv(N, tn)
    kernel = functools.partial(agg_kernel, count_col=count_col,
                               n_total=N, tn=tn)
    blk = (2 * (tn * Dp * feat.dtype.itemsize + tn * 4 + Sp * Dp * 4)
           + 3 * Sp * Dp * 4)
    return pl.pallas_call(
        kernel,
        out_shape=jax.ShapeDtypeStruct((B, Sp, Dp), jnp.float32),
        grid=(B, n_blocks),
        in_specs=[
            pl.BlockSpec((1, tn, Dp), lambda b, n: (b, n, 0)),
            pl.BlockSpec((1, 1, tn), lambda b, n: (b, 0, n)),
            pl.BlockSpec((1, Sp, Dp), lambda b, n: (b, 0, 0)),
        ],
        out_specs=pl.BlockSpec((1, Sp, Dp), lambda b, n: (b, 0, 0)),
        scratch_shapes=[pltpu.VMEM((Sp, Dp), jnp.float32)],
        compiler_params=pltpu.CompilerParams(
            dimension_semantics=("parallel", "arbitrary"),
            vmem_limit_bytes=_vmem_limit(blk)),
    )(feat, seg_flat, pos)


# ----------------------------------------------------------------------------
# Plain-JAX glue
# ----------------------------------------------------------------------------
def extract_patches(x_nhwc, k, stride, pad):
    """(B, H, W, C) -> (B, Ho, Wo, C*k*k); feature order channel-major (c, kh, kw)."""
    return jax.lax.conv_general_dilated_patches(
        x_nhwc, (k, k), (stride, stride), ((pad, pad), (pad, pad)),
        dimension_numbers=("NHWC", "HWIO", "NHWC"))


def synthetic_voronoi(B, H, W, grid_hw=(2, 3)):
    """Deterministic stand-in for VoronoiPropagation (see TODO at top)."""
    gy, gx = grid_hw
    ys = (jnp.arange(gy, dtype=jnp.float32) + 0.5) * (H / gy)
    xs = (jnp.arange(gx, dtype=jnp.float32) + 0.5) * (W / gx)
    cy, cx = jnp.meshgrid(ys, xs, indexing="ij")
    cent = jnp.stack([cx.reshape(-1), cy.reshape(-1)], axis=-1)        # (K, 2) (x, y)
    hh, ww = jnp.meshgrid(jnp.arange(H, dtype=jnp.float32),
                          jnp.arange(W, dtype=jnp.float32), indexing="ij")
    d2 = (hh[..., None] - cent[None, None, :, 1]) ** 2 \
        + (ww[..., None] - cent[None, None, :, 0]) ** 2                # (H, W, K)
    seg = jnp.argmin(d2, axis=-1).astype(jnp.int32)                    # (H, W)
    segments = jnp.broadcast_to(seg, (B, H, W))
    centroid_coords = jnp.broadcast_to(cent, (B, cent.shape[0], 2))
    return centroid_coords.astype(jnp.float32), segments


def init_params(key, n_channels, embed_dim, eps=1e-5):
    ks = jax.random.split(key, 8)
    c1 = 64
    c1_pad = _round_up(c1, 128)                 # lane-dense conv1 output (128)
    k1 = 7 * 7 * n_channels                     # 147: full-dim block, no K pad
    d_pad = _round_up(embed_dim + 1, 128)       # +1 spare lane = "ones" counter
    k2 = 3 * 3 * c1_pad                         # 1152: padded channels carried

    # cnn[0]: Conv2d(C, 64, 7, stride=2, padding=3) + BN(64), folded
    w1_t = jax.random.normal(ks[0], (c1, n_channels, 7, 7), jnp.float32) * 0.05
    b1 = jax.random.normal(ks[1], (c1,), jnp.float32) * 0.02
    m1 = jax.random.normal(ks[2], (c1,), jnp.float32) * 0.01
    v1 = jnp.ones((c1,), jnp.float32)
    s1 = 1.0 / jnp.sqrt(v1 + eps)
    sh1 = (b1 - m1) * s1
    # Patch feature order is channel-major: row = c*49 + i*7 + j.
    w1 = jnp.transpose(w1_t, (1, 2, 3, 0)).reshape(k1, c1)
    w1_pad = jnp.zeros((k1, c1_pad), jnp.float32).at[:, :c1].set(w1)
    scale1 = jnp.zeros((1, c1_pad), jnp.float32).at[0, :c1].set(s1)
    shift1 = jnp.zeros((1, c1_pad), jnp.float32).at[0, :c1].set(sh1)

    # cnn[3]: Conv2d(64, embed_dim, 3, stride=2, padding=1) + BN(embed_dim)
    w2_t = jax.random.normal(ks[3], (embed_dim, c1, 3, 3), jnp.float32) * 0.05
    b2 = jax.random.normal(ks[4], (embed_dim,), jnp.float32) * 0.02
    m2 = jax.random.normal(ks[5], (embed_dim,), jnp.float32) * 0.01
    v2 = jnp.ones((embed_dim,), jnp.float32)
    s2 = 1.0 / jnp.sqrt(v2 + eps)
    sh2 = (b2 - m2) * s2
    # Rows for padded input channels [64:128) stay zero.
    w2_full = jnp.zeros((c1_pad, 3, 3, d_pad), jnp.float32)
    w2_full = w2_full.at[:c1, :, :, :embed_dim].set(jnp.transpose(w2_t, (1, 2, 3, 0)))
    w2_pad = w2_full.reshape(k2, d_pad)
    scale2 = jnp.zeros((1, d_pad), jnp.float32).at[0, :embed_dim].set(s2)
    shift2 = jnp.zeros((1, d_pad), jnp.float32).at[0, :embed_dim].set(sh2)
    # Counter lane: scale=0, shift=1 -> ReLU(0*x+1)=1 written by the conv2
    # epilogue; removes a full HBM read-modify-write pass over the features.
    shift2 = shift2.at[0, embed_dim].set(1.0)

    # positional_embedding: Linear(2, embed_dim), padded to lane-dense D
    w_pos = jax.random.normal(ks[6], (embed_dim, 2), jnp.float32) * 0.1
    b_pos = jax.random.normal(ks[7], (embed_dim,), jnp.float32) * 0.1
    w_pos_pad = jnp.zeros((2, d_pad), jnp.float32).at[:, :embed_dim].set(w_pos.T)
    b_pos_pad = jnp.zeros((1, d_pad), jnp.float32).at[0, :embed_dim].set(b_pos)

    return dict(
        w1=w1_pad.astype(jnp.bfloat16), scale1=scale1, shift1=shift1,
        w2=w2_pad.astype(jnp.bfloat16), scale2=scale2, shift2=shift2,
        w_pos=w_pos_pad, b_pos=b_pos_pad,
    )


def superpixel_tokenizer_forward(img, params, max_segments, embed_dim):
    """img: (B, C, H, W) float32  ->  embeddings (B, max_segments, embed_dim)."""
    B, C, H, W = img.shape
    centroid_coords, segments = synthetic_voronoi(B, H, W)

    x = jnp.transpose(img, (0, 2, 3, 1)).astype(jnp.bfloat16)     # NHWC, bf16

    k1, c1_pad = params["w1"].shape                                # (147, 128)
    k2, d_pad = params["w2"].shape                                 # (1152, 128)

    # cnn: conv7x7 s2 + BN + ReLU ; conv3x3 s2 + BN + ReLU (BN folded in-kernel)
    p1 = extract_patches(x, 7, 2, 3)                               # (B, Ho1, Wo1, 147)
    _, Ho1, Wo1, _ = p1.shape
    y1 = conv_bn_relu(p1.reshape(B * Ho1 * Wo1, k1),
                      params["w1"], params["scale1"], params["shift1"],
                      jnp.bfloat16)                                # (B*Ho1*Wo1, 128)
    # Keep the padded (zero) channels flowing into conv2 - no slice copy.
    y1 = y1.reshape(B, Ho1, Wo1, c1_pad)

    p2 = extract_patches(y1, 3, 2, 1)                              # (B, Hf, Wf, 1152)
    _, Hf, Wf, _ = p2.shape
    feats = conv_bn_relu(p2.reshape(B * Hf * Wf, k2),
                         params["w2"], params["scale2"], params["shift2"],
                         jnp.bfloat16)                             # (B*N, d_pad)
    N = Hf * Wf
    feats = feats.reshape(B, N, d_pad)
    # Lane `embed_dim` already holds the 1.0 counter (shift2 trick).

    # nearest-neighbor downsample of segments (F.interpolate 'nearest')
    ridx = jnp.floor(jnp.arange(Hf) * (H / Hf)).astype(jnp.int32)
    cidx = jnp.floor(jnp.arange(Wf) * (W / Wf)).astype(jnp.int32)
    seg_ds = segments[:, ridx][:, :, cidx].astype(jnp.int32)       # (B, Hf, Wf)
    seg_flat = seg_ds.reshape(B, 1, N)

    # positional embedding on normalized centroids: tiny, precomputed in JAX,
    # added only in the aggregation kernel's finalize step.
    s_pad = _round_up(max_segments, 16)
    n_cent = centroid_coords.shape[1]
    nc = min(n_cent, max_segments)
    cent_norm = centroid_coords / jnp.array([float(W), float(H)], jnp.float32)
    cent_pad = jnp.zeros((B, s_pad, 2), jnp.float32).at[:, :nc].set(cent_norm[:, :nc])
    mask = jnp.zeros((B, s_pad, 1), jnp.float32).at[:, :nc].set(1.0)
    pos = (cent_pad @ params["w_pos"] + params["b_pos"]) * mask    # (B, s_pad, d_pad)

    out = segment_mean_plus_pos(feats, seg_flat, pos, count_col=embed_dim)
    return out[:, :max_segments, :embed_dim]


# ----------------------------------------------------------------------------
if __name__ == "__main__":
    B, C, H, W = 2, 3, 16, 16
    max_segments, embed_dim = 8, 32

    key = jax.random.PRNGKey(0)
    k_img, k_par = jax.random.split(key)
    img = jax.random.normal(k_img, (B, C, H, W), jnp.float32)
    params = init_params(k_par, C, embed_dim)

    fwd = jax.jit(functools.partial(superpixel_tokenizer_forward,
                                    max_segments=max_segments,
                                    embed_dim=embed_dim))
    out = fwd(img, params)
    out = jax.block_until_ready(out)
    assert out.shape == (B, max_segments, embed_dim), out.shape
    assert out.dtype == jnp.float32
    assert bool(jnp.all(jnp.isfinite(out)))
    print("KERNEL_OK")
</pallas_src>

<mosaic_0001>
module attributes {stable_mosaic.version = 11 : i64} {
  func.func @conv_mm_kernel(%arg0: i32, %arg1: memref<128x147xbf16, #tpu.memory_space<vmem>>, %arg2: memref<147x128xbf16, #tpu.memory_space<vmem>>, %arg3: memref<1x128xf32, #tpu.memory_space<vmem>>, %arg4: memref<1x128xf32, #tpu.memory_space<vmem>>, %arg5: memref<128x128xbf16, #tpu.memory_space<vmem>>) attributes {dimension_semantics = [#tpu.dimension_semantics<parallel>], iteration_bounds = array<i64: 1>, scalar_prefetch = 0 : i64, scratch_operands = 0 : i64, tpu.core_type = #tpu.core_type<tc>, window_params = [{transform_indices = @transform_0, window_bounds = array<i64: 128, 147>}, {pipeline_mode = #tpu.pipeline_mode<synchronous>, transform_indices = @transform_1, window_bounds = array<i64: 147, 128>}, {pipeline_mode = #tpu.pipeline_mode<synchronous>, transform_indices = @transform_2, window_bounds = array<i64: 1, 128>}, {pipeline_mode = #tpu.pipeline_mode<synchronous>, transform_indices = @transform_3, window_bounds = array<i64: 1, 128>}, {transform_indices = @transform_4, window_bounds = array<i64: 128, 128>}]} {
    %c0 = arith.constant 0 : index
    %c0_0 = arith.constant 0 : index
    %0 = vector.load %arg1[%c0, %c0_0] : memref<128x147xbf16, #tpu.memory_space<vmem>>, vector<128x147xbf16>
    %c0_1 = arith.constant 0 : index
    %c0_2 = arith.constant 0 : index
    %1 = vector.load %arg2[%c0_1, %c0_2] : memref<147x128xbf16, #tpu.memory_space<vmem>>, vector<147x128xbf16>
    %cst = arith.constant dense<0.000000e+00> : vector<128x128xf32>
    %2 = tpu.matmul %0, %1, %cst {dimension_numbers = #tpu.dot_dimension_numbers<[1], [0], [0], [1], [0, 0, 1, 1], [], []>} : vector<128x147xbf16>, vector<147x128xbf16>, vector<128x128xf32> -> vector<128x128xf32>
    %c0_3 = arith.constant 0 : index
    %c0_4 = arith.constant 0 : index
    %3 = vector.load %arg3[%c0_3, %c0_4] : memref<1x128xf32, #tpu.memory_space<vmem>>, vector<1x128xf32>
    %4 = vector.broadcast %3 : vector<1x128xf32> to vector<128x128xf32>
    %5 = arith.mulf %2, %4 : vector<128x128xf32>
    %c0_5 = arith.constant 0 : index
    %c0_6 = arith.constant 0 : index
    %6 = vector.load %arg4[%c0_5, %c0_6] : memref<1x128xf32, #tpu.memory_space<vmem>>, vector<1x128xf32>
    %7 = vector.broadcast %6 : vector<1x128xf32> to vector<128x128xf32>
    %8 = arith.addf %5, %7 : vector<128x128xf32>
    %cst_7 = arith.constant 0.000000e+00 : f32
    %9 = vector.broadcast %cst_7 : f32 to vector<128x128xf32>
    %10 = arith.maximumf %8, %9 : vector<128x128xf32>
    %11 = arith.truncf %10 : vector<128x128xf32> to vector<128x128xbf16>
    %c0_8 = arith.constant 0 : index
    %c0_9 = arith.constant 0 : index
    %12 = vector.load %arg5[%c0_8, %c0_9] : memref<128x128xbf16, #tpu.memory_space<vmem>>, vector<128x128xbf16>
    tpu.vector_store %arg5[%c0_8, %c0_9], %11 {strides = array<i32>} : memref<128x128xbf16, #tpu.memory_space<vmem>>, vector<128x128xbf16>,
    return
  }
  func.func @transform_0(%arg0: i32) -> (i32, i32) {
    %c0_i32 = arith.constant 0 : i32
    %c0_i32_0 = arith.constant 0 : i32
    return %arg0, %c0_i32 : i32, i32
  }
  func.func @transform_1(%arg0: i32) -> (i32, i32) {
    %c0_i32 = arith.constant 0 : i32
    %c0_i32_0 = arith.constant 0 : i32
    %c0_i32_1 = arith.constant 0 : i32
    return %c0_i32, %c0_i32_0 : i32, i32
  }
  func.func @transform_2(%arg0: i32) -> (i32, i32) {
    %c0_i32 = arith.constant 0 : i32
    %c0_i32_0 = arith.constant 0 : i32
    %c0_i32_1 = arith.constant 0 : i32
    return %c0_i32, %c0_i32_0 : i32, i32
  }
  func.func @transform_3(%arg0: i32) -> (i32, i32) {
    %c0_i32 = arith.constant 0 : i32
    %c0_i32_0 = arith.constant 0 : i32
    %c0_i32_1 = arith.constant 0 : i32
    return %c0_i32, %c0_i32_0 : i32, i32
  }
  func.func @transform_4(%arg0: i32) -> (i32, i32) {
    %c0_i32 = arith.constant 0 : i32
    %c0_i32_0 = arith.constant 0 : i32
    return %arg0, %c0_i32 : i32, i32
  }
}

module attributes {stable_mosaic.version = 11 : i64} {
  func.func @conv_mm_kernel(%arg0: i32, %arg1: memref<32x1152xbf16, #tpu.memory_space<vmem>>, %arg2: memref<1152x128xbf16, #tpu.memory_space<vmem>>, %arg3: memref<1x128xf32, #tpu.memory_space<vmem>>, %arg4: memref<1x128xf32, #tpu.memory_space<vmem>>, %arg5: memref<32x128xbf16, #tpu.memory_space<vmem>>) attributes {dimension_semantics = [#tpu.dimension_semantics<parallel>], iteration_bounds = array<i64: 1>, scalar_prefetch = 0 : i64, scratch_operands = 0 : i64, tpu.core_type = #tpu.core_type<tc>, window_params = [{transform_indices = @transform_0, window_bounds = array<i64: 32, 1152>}, {pipeline_mode = #tpu.pipeline_mode<synchronous>, transform_indices = @transform_1, window_bounds = array<i64: 1152, 128>}, {pipeline_mode = #tpu.pipeline_mode<synchronous>, transform_indices = @transform_2, window_bounds = array<i64: 1, 128>}, {pipeline_mode = #tpu.pipeline_mode<synchronous>, transform_indices = @transform_3, window_bounds = array<i64: 1, 128>}, {transform_indices = @transform_4, window_bounds = array<i64: 32, 128>}]} {
    %c0 = arith.constant 0 : index
    %c0_0 = arith.constant 0 : index
    %0 = vector.load %arg1[%c0, %c0_0] : memref<32x1152xbf16, #tpu.memory_space<vmem>>, vector<32x1152xbf16>
    %c0_1 = arith.constant 0 : index
    %c0_2 = arith.constant 0 : index
    %1 = vector.load %arg2[%c0_1, %c0_2] : memref<1152x128xbf16, #tpu.memory_space<vmem>>, vector<1152x128xbf16>
    %cst = arith.constant dense<0.000000e+00> : vector<32x128xf32>
    %2 = tpu.matmul %0, %1, %cst {dimension_numbers = #tpu.dot_dimension_numbers<[1], [0], [0], [1], [0, 0, 1, 1], [], []>} : vector<32x1152xbf16>, vector<1152x128xbf16>, vector<32x128xf32> -> vector<32x128xf32>
    %c0_3 = arith.constant 0 : index
    %c0_4 = arith.constant 0 : index
    %3 = vector.load %arg3[%c0_3, %c0_4] : memref<1x128xf32, #tpu.memory_space<vmem>>, vector<1x128xf32>
    %4 = vector.broadcast %3 : vector<1x128xf32> to vector<32x128xf32>
    %5 = arith.mulf %2, %4 : vector<32x128xf32>
    %c0_5 = arith.constant 0 : index
    %c0_6 = arith.constant 0 : index
    %6 = vector.load %arg4[%c0_5, %c0_6] : memref<1x128xf32, #tpu.memory_space<vmem>>, vector<1x128xf32>
    %7 = vector.broadcast %6 : vector<1x128xf32> to vector<32x128xf32>
    %8 = arith.addf %5, %7 : vector<32x128xf32>
    %cst_7 = arith.constant 0.000000e+00 : f32
    %9 = vector.broadcast %cst_7 : f32 to vector<32x128xf32>
    %10 = arith.maximumf %8, %9 : vector<32x128xf32>
    %11 = arith.truncf %10 : vector<32x128xf32> to vector<32x128xbf16>
    %c0_8 = arith.constant 0 : index
    %c0_9 = arith.constant 0 : index
    %12 = vector.load %arg5[%c0_8, %c0_9] : memref<32x128xbf16, #tpu.memory_space<vmem>>, vector<32x128xbf16>
    tpu.vector_store %arg5[%c0_8, %c0_9], %11 {strides = array<i32>} : memref<32x128xbf16, #tpu.memory_space<vmem>>, vector<32x128xbf16>,
    return
  }
  func.func @transform_0(%arg0: i32) -> (i32, i32) {
    %c0_i32 = arith.constant 0 : i32
    %c0_i32_0 = arith.constant 0 : i32
    return %arg0, %c0_i32 : i32, i32
  }
  func.func @transform_1(%arg0: i32) -> (i32, i32) {
    %c0_i32 = arith.constant 0 : i32
    %c0_i32_0 = arith.constant 0 : i32
    %c0_i32_1 = arith.constant 0 : i32
    return %c0_i32, %c0_i32_0 : i32, i32
  }
  func.func @transform_2(%arg0: i32) -> (i32, i32) {
    %c0_i32 = arith.constant 0 : i32
    %c0_i32_0 = arith.constant 0 : i32
    %c0_i32_1 = arith.constant 0 : i32
    return %c0_i32, %c0_i32_0 : i32, i32
  }
  func.func @transform_3(%arg0: i32) -> (i32, i32) {
    %c0_i32 = arith.constant 0 : i32
    %c0_i32_0 = arith.constant 0 : i32
    %c0_i32_1 = arith.constant 0 : i32
    return %c0_i32, %c0_i32_0 : i32, i32
  }
  func.func @transform_4(%arg0: i32) -> (i32, i32) {
    %c0_i32 = arith.constant 0 : i32
    %c0_i32_0 = arith.constant 0 : i32
    return %arg0, %c0_i32 : i32, i32
  }
}

module attributes {stable_mosaic.version = 11 : i64} {
  func.func @agg_kernel(%arg0: i32, %arg1: i32, %arg2: memref<1x16x128xbf16, #tpu.memory_space<vmem>>, %arg3: memref<1x1x16xi32, #tpu.memory_space<vmem>>, %arg4: memref<1x16x128xf32, #tpu.memory_space<vmem>>, %arg5: memref<1x16x128xf32, #tpu.memory_space<vmem>>, %arg6: memref<16x128xf32, #tpu.memory_space<vmem>>) attributes {dimension_semantics = [#tpu.dimension_semantics<parallel>, #tpu.dimension_semantics<arbitrary>], iteration_bounds = array<i64: 2, 1>, scalar_prefetch = 0 : i64, scratch_operands = 1 : i64, tpu.core_type = #tpu.core_type<tc>, window_params = [{transform_indices = @transform_0, window_bounds = array<i64: 1, 16, 128>}, {transform_indices = @transform_1, window_bounds = array<i64: 1, 1, 16>}, {transform_indices = @transform_2, window_bounds = array<i64: 1, 16, 128>}, {transform_indices = @transform_3, window_bounds = array<i64: 1, 16, 128>}]} {
    %c0_i32 = arith.constant 0 : i32
    %0 = arith.cmpi eq, %arg1, %c0_i32 : i32
    %1 = arith.extui %0 : i1 to i32
    %c0_i32_0 = arith.constant 0 : i32
    %2 = arith.cmpi ne, %1, %c0_i32_0 : i32
    scf.if %2 {
      %cst_12 = arith.constant 0.000000e+00 : f32
      %20 = vector.broadcast %cst_12 : f32 to vector<16x128xf32>
      %c0_13 = arith.constant 0 : index
      %c0_14 = arith.constant 0 : index
      %21 = vector.load %arg6[%c0_13, %c0_14] : memref<16x128xf32, #tpu.memory_space<vmem>>, vector<16x128xf32>
      tpu.vector_store %arg6[%c0_13, %c0_14], %20 {strides = array<i32>} : memref<16x128xf32, #tpu.memory_space<vmem>>, vector<16x128xf32>,
    } else {
    }
    %c0 = arith.constant 0 : index
    %c0_1 = arith.constant 0 : index
    %c0_2 = arith.constant 0 : index
    %3 = vector.load %arg2[%c0, %c0_1, %c0_2] : memref<1x16x128xbf16, #tpu.memory_space<vmem>>, vector<1x16x128xbf16>
    %4 = vector.shape_cast %3 : vector<1x16x128xbf16> to vector<16x128xbf16>
    %c0_3 = arith.constant 0 : index
    %c0_4 = arith.constant 0 : index
    %c0_5 = arith.constant 0 : index
    %5 = vector.load %arg3[%c0_3, %c0_4, %c0_5] : memref<1x1x16xi32, #tpu.memory_space<vmem>>, vector<1x1x16xi32>
    %6 = vector.shape_cast %5 : vector<1x1x16xi32> to vector<1x16xi32>
    %7 = tpu.iota {dimensions = array<i32: 0>} : vector<16x16xi32>
    %8 = vector.broadcast %6 : vector<1x16xi32> to vector<16x16xi32>
    %9 = arith.cmpi eq, %7, %8 : vector<16x16xi32>
    %10 = arith.extui %9 : vector<16x16xi1> to vector<16x16xi32>
    %11 = arith.sitofp %10 : vector<16x16xi32> to vector<16x16xf32>
    %12 = arith.truncf %11 : vector<16x16xf32> to vector<16x16xbf16>
    %c0_6 = arith.constant 0 : index
    %c0_7 = arith.constant 0 : index
    %13 = vector.load %arg6[%c0_6, %c0_7] : memref<16x128xf32, #tpu.memory_space<vmem>>, vector<16x128xf32>
    %cst = arith.constant dense<0.000000e+00> : vector<16x128xf32>
    %14 = tpu.matmul %12, %4, %cst {dimension_numbers = #tpu.dot_dimension_numbers<[1], [0], [0], [1], [0, 0, 1, 1], [], []>} : vector<16x16xbf16>, vector<16x128xbf16>, vector<16x128xf32> -> vector<16x128xf32>
    %15 = arith.addf %13, %14 : vector<16x128xf32>
    %c0_8 = arith.constant 0 : index
    %c0_9 = arith.constant 0 : index
    %16 = vector.load %arg6[%c0_8, %c0_9] : memref<16x128xf32, #tpu.memory_space<vmem>>, vector<16x128xf32>
    tpu.vector_store %arg6[%c0_8, %c0_9], %15 {strides = array<i32>} : memref<16x128xf32, #tpu.memory_space<vmem>>, vector<16x128xf32>,
    %c0_i32_10 = arith.constant 0 : i32
    %17 = arith.cmpi eq, %arg1, %c0_i32_10 : i32
    %18 = arith.extui %17 : i1 to i32
    %c0_i32_11 = arith.constant 0 : i32
    %19 = arith.cmpi ne, %18, %c0_i32_11 : i32
    scf.if %19 {
      %c0_12 = arith.constant 0 : index
      %c0_13 = arith.constant 0 : index
      %20 = vector.load %arg6[%c0_12, %c0_13] : memref<16x128xf32, #tpu.memory_space<vmem>>, vector<16x128xf32>
      %21 = vector.extract_strided_slice %20 {offsets = [0, 32], sizes = [16, 1], strides = [1, 1]} : vector<16x128xf32> to vector<16x1xf32>
      %cst_14 = arith.constant 1.000000e+00 : f32
      %22 = vector.broadcast %cst_14 : f32 to vector<16x1xf32>
      %23 = arith.maximumf %21, %22 : vector<16x1xf32>
      %24 = tpu.reciprocal %23 {approx = true} : vector<16x1xf32> -> vector<16x1xf32>
      %25 = vector.broadcast %24 : vector<16x1xf32> to vector<16x128xf32>
      %26 = arith.mulf %20, %25 : vector<16x128xf32>
      %c0_15 = arith.constant 0 : index
      %c0_16 = arith.constant 0 : index
      %c0_17 = arith.constant 0 : index
      %27 = vector.load %arg4[%c0_15, %c0_16, %c0_17] : memref<1x16x128xf32, #tpu.memory_space<vmem>>, vector<1x16x128xf32>
      %28 = vector.shape_cast %27 : vector<1x16x128xf32> to vector<16x128xf32>
      %29 = arith.addf %26, %28 : vector<16x128xf32>
      %c0_18 = arith.constant 0 : index
      %c0_19 = arith.constant 0 : index
      %c0_20 = arith.constant 0 : index
      %30 = vector.load %arg5[%c0_18, %c0_19, %c0_20] : memref<1x16x128xf32, #tpu.memory_space<vmem>>, vector<1x16x128xf32>
      %31 = vector.shape_cast %30 : vector<1x16x128xf32> to vector<16x128xf32>
      %32 = vector.shape_cast %29 : vector<16x128xf32> to vector<1x16x128xf32>
      tpu.vector_store %arg5[%c0_18, %c0_19, %c0_20], %32 {strides = array<i32>} : memref<1x16x128xf32, #tpu.memory_space<vmem>>, vector<1x16x128xf32>,
    } else {
    }
    return
  }
  func.func @transform_0(%arg0: i32, %arg1: i32) -> (i32, i32, i32) {
    %c0_i32 = arith.constant 0 : i32
    %c0_i32_0 = arith.constant 0 : i32
    return %arg0, %arg1, %c0_i32 : i32, i32, i32
  }
  func.func @transform_1(%arg0: i32, %arg1: i32) -> (i32, i32, i32) {
    %c0_i32 = arith.constant 0 : i32
    %c0_i32_0 = arith.constant 0 : i32
    return %arg0, %c0_i32, %arg1 : i32, i32, i32
  }
  func.func @transform_2(%arg0: i32, %arg1: i32) -> (i32, i32, i32) {
    %c0_i32 = arith.constant 0 : i32
    %c0_i32_0 = arith.constant 0 : i32
    %c0_i32_1 = arith.constant 0 : i32
    return %arg0, %c0_i32, %c0_i32_0 : i32, i32, i32
  }
  func.func @transform_3(%arg0: i32, %arg1: i32) -> (i32, i32, i32) {
    %c0_i32 = arith.constant 0 : i32
    %c0_i32_0 = arith.constant 0 : i32
    %c0_i32_1 = arith.constant 0 : i32
    return %arg0, %c0_i32, %c0_i32_0 : i32, i32, i32
  }
}

</mosaic_0001>

<llo_original>
// kernel: superpixel_tokenizer_forward.3
$region0: #{superpixel_tokenizer_forward.3}
  #allocation0 [shape = 'u32[]', space=smem, size = 0x4, offset = 0x4, fixed_abs, tag = 'smem constant byte address 0x4 - core index']
  #allocation1 [shape = 'u32[144,128]{1,0:T(1,128)}', space=vmem, size = 0x12000, scoped, tag = 'internal scratch']
  %s0 = inlined_call_operand.vmem [shape: bf16[128,147], index: 0, kind: input, shape index: {}]
  %s1 = inlined_call_operand.vmem [shape: bf16[147,128], index: 1, kind: input, shape index: {}]
  %s2 = inlined_call_operand.vmem [shape: f32[1,128], index: 2, kind: input, shape index: {}]
  %s3 = inlined_call_operand.vmem [shape: f32[1,128], index: 3, kind: input, shape index: {}]
  %s4 = inlined_call_operand.vmem [shape: bf16[128,128], index: 4, kind: output, shape index: {}]
  %s5 = sld [smem:[#allocation0]]
  $region26: #{superpixel_tokenizer_forward.3} parent=0
    _
  %s7 = ssub.s32 1, %s5
  %s8 = scalar_select 0, %s7, %s5
  // Predicated region
  $region2: #{superpixel_tokenizer_forward.3} parent=0 // pred_check
    _
  $region3: #{superpixel_tokenizer_forward.3} parent=0 // pred_check_branch
    %10 = sbr.rel (0) target = $region5
  $region4: #{superpixel_tokenizer_forward.3} parent=0 // pred_region
    _
  $region5: #{superpixel_tokenizer_forward.3} parent=0 // pred_fallthru
    _
  // Predicated region
  $region6: #{superpixel_tokenizer_forward.3} parent=0 // pred_check
    _
  $region7: #{superpixel_tokenizer_forward.3} parent=0 // pred_check_branch
    %12 = sbr.rel (0) target = $region9
  $region8: #{superpixel_tokenizer_forward.3} parent=0 // pred_region
    _
  $region9: #{superpixel_tokenizer_forward.3} parent=0 // pred_fallthru
    _
  // Predicated region
  $region10: #{superpixel_tokenizer_forward.3} parent=0 // pred_check
    _
  $region11: #{superpixel_tokenizer_forward.3} parent=0 // pred_check_branch
    %14 = sbr.rel (0) target = $region13
  $region12: #{superpixel_tokenizer_forward.3} parent=0 // pred_region
    _
  $region13: #{superpixel_tokenizer_forward.3} parent=0 // pred_fallthru
    _
  // Predicated region
  $region14: #{superpixel_tokenizer_forward.3} parent=0 // pred_check
    _
  $region15: #{superpixel_tokenizer_forward.3} parent=0 // pred_check_branch
    %16 = sbr.rel (0) target = $region17
  $region16: #{superpixel_tokenizer_forward.3} parent=0 // pred_region
    _
  $region17: #{superpixel_tokenizer_forward.3} parent=0 // pred_fallthru
    _
  %v18 = vld [vmem:[%s0] sm:$0xff]
  %v19 = vld [vmem:[%s0 + $0x8] sm:$0xff]
  %v20 = vld [vmem:[%s0 + $0x10] sm:$0xff]
  %v21 = vld [vmem:[%s0 + $0x18] sm:$0xff]
  %v22 = vld [vmem:[%s0 + $0x20] sm:$0xff]
  %v23 = vld [vmem:[%s0 + $0x28] sm:$0xff]
  %v24 = vld [vmem:[%s0 + $0x30] sm:$0xff]
  %v25 = vld [vmem:[%s0 + $0x38] sm:$0xff]
  %v26 = vld [vmem:[%s0 + $0x40] sm:$0xff]
  %v27 = vld [vmem:[%s0 + $0x48] sm:$0xff]
  %v28 = vld [vmem:[%s0 + $0x50] sm:$0xff]
  %v29 = vld [vmem:[%s0 + $0x58] sm:$0xff]
  %v30 = vld [vmem:[%s0 + $0x60] sm:$0xff]
  %v31 = vld [vmem:[%s0 + $0x68] sm:$0xff]
  %v32 = vld [vmem:[%s0 + $0x70] sm:$0xff]
  %v33 = vld [vmem:[%s0 + $0x78] sm:$0xff]
  %v34 = vld [vmem:[%s1] sm:$0xf]
  %v35 = vld [vmem:[%s1 + $0x4] sm:$0xf]
  %v36 = vld [vmem:[%s1 + $0x8] sm:$0xf]
  %v37 = vld [vmem:[%s1 + $0xc] sm:$0xf]
  %v38 = vld [vmem:[%s1 + $0x10] sm:$0xf]
  %v39 = vld [vmem:[%s1 + $0x14] sm:$0xf]
  %v40 = vld [vmem:[%s1 + $0x18] sm:$0xf]
  %v41 = vld [vmem:[%s1 + $0x1c] sm:$0xf]
  %v42 = vld [vmem:[%s1 + $0x20] sm:$0xf]
  %v43 = vld [vmem:[%s1 + $0x24] sm:$0xf]
  %v44 = vld [vmem:[%s1 + $0x28] sm:$0xf]
  %v45 = vld [vmem:[%s1 + $0x2c] sm:$0xf]
  %v46 = vld [vmem:[%s1 + $0x30] sm:$0xf]
  %v47 = vld [vmem:[%s1 + $0x34] sm:$0xf]
  %v48 = vld [vmem:[%s1 + $0x38] sm:$0xf]
  %v49 = vld [vmem:[%s1 + $0x3c] sm:$0xf]
  %v50 = vld [vmem:[%s1 + $0x40] sm:$0xf]
  %v51 = vld [vmem:[%s1 + $0x44] sm:$0xf]
  %v52 = vld [vmem:[%s1 + $0x48] sm:$0x3]
  %v69 = vunpack.c.l.b16 %v18
  %v70 = vunpack.c.h.b16 %v18
  %v71 = vunpack.c.l.b16 %v19
  %v72 = vunpack.c.h.b16 %v19
  %v73 = vunpack.c.l.b16 %v20
  %v74 = vunpack.c.h.b16 %v20
  %v75 = vunpack.c.l.b16 %v21
  %v76 = vunpack.c.h.b16 %v21
  %v77 = vunpack.c.l.b16 %v22
  %v78 = vunpack.c.h.b16 %v22
  %v79 = vunpack.c.l.b16 %v23
  %v80 = vunpack.c.h.b16 %v23
  %v81 = vunpack.c.l.b16 %v24
  %v82 = vunpack.c.h.b16 %v24
  %v83 = vunpack.c.l.b16 %v25
  %v84 = vunpack.c.h.b16 %v25
  %v85 = vunpack.c.l.b16 %v26
  %v86 = vunpack.c.h.b16 %v26
  %v87 = vunpack.c.l.b16 %v27
  %v88 = vunpack.c.h.b16 %v27
  %v89 = vunpack.c.l.b16 %v28
  %v90 = vunpack.c.h.b16 %v28
  %v91 = vunpack.c.l.b16 %v29
  %v92 = vunpack.c.h.b16 %v29
  %v93 = vunpack.c.l.b16 %v30
  %v94 = vunpack.c.h.b16 %v30
  %v95 = vunpack.c.l.b16 %v31
  %v96 = vunpack.c.h.b16 %v31
  %v97 = vunpack.c.l.b16 %v32
  %v98 = vunpack.c.h.b16 %v32
  %v99 = vunpack.c.l.b16 %v33
  %v100 = vunpack.c.h.b16 %v33
  %v101 = vpack.c.b16 %v71, %v69
  %v102 = vpack.c.b16 %v72, %v70
  %v103 = vpack.c.b16 %v75, %v73
  %v104 = vpack.c.b16 %v76, %v74
  %v105 = vpack.c.b16 %v79, %v77
  %v106 = vpack.c.b16 %v80, %v78
  %v107 = vpack.c.b16 %v83, %v81
  %v108 = vpack.c.b16 %v84, %v82
  %v109 = vpack.c.b16 %v87, %v85
  %v110 = vpack.c.b16 %v88, %v86
  %v111 = vpack.c.b16 %v91, %v89
  %v112 = vpack.c.b16 %v92, %v90
  %v113 = vpack.c.b16 %v95, %v93
  %v114 = vpack.c.b16 %v96, %v94
  %v115 = vpack.c.b16 %v99, %v97
  %v116 = vpack.c.b16 %v100, %v98
  %v144 = vunpack.c.l.b16 %v34
  %v145 = vunpack.c.l.b16 %v35
  %v146 = vunpack.c.l.b16 %v36
  %v147 = vunpack.c.l.b16 %v37
  %v148 = vunpack.c.l.b16 %v38
  %v149 = vunpack.c.l.b16 %v39
  %v150 = vunpack.c.l.b16 %v40
  %v151 = vunpack.c.l.b16 %v41
  %v152 = vunpack.c.l.b16 %v42
  %v153 = vunpack.c.l.b16 %v43
  %v154 = vunpack.c.l.b16 %v44
  %v155 = vunpack.c.l.b16 %v45
  %v156 = vunpack.c.l.b16 %v46
  %v157 = vunpack.c.l.b16 %v47
  %v158 = vunpack.c.l.b16 %v48
  %v159 = vunpack.c.l.b16 %v49
  %v160 = vunpack.c.l.b16 %v50
  %v161 = vunpack.c.l.b16 %v51
  %v162 = vunpack.c.l.b16 %v52
  %v163 = vpack.c.b16 %v145, %v144
  %v164 = vpack.c.b16 %v147, %v146
  %v165 = vpack.c.b16 %v149, %v148
  %v166 = vpack.c.b16 %v151, %v150
  %v167 = vpack.c.b16 %v153, %v152
  %v168 = vpack.c.b16 %v155, %v154
  %v169 = vpack.c.b16 %v157, %v156
  %v170 = vpack.c.b16 %v159, %v158
  %v171 = vpack.c.b16 %v161, %v160
  %v172 = vpack.c.b16 %v162, %v162
  %vm182 = vcmask 154624
  %v184 = vsel %vm182, %v102, 0
  %v187 = vsel %vm182, %v104, 0
  %v190 = vsel %vm182, %v106, 0
  %v193 = vsel %vm182, %v108, 0
  %v196 = vsel %vm182, %v110, 0
  %v199 = vsel %vm182, %v112, 0
  %v202 = vsel %vm182, %v114, 0
  %v205 = vsel %vm182, %v116, 0
  %vm207 = vcmask 1040384
  %vm208 = vcmask 1041408
  %v209 = vsel %vm207, 4294967295, 65535
  %v210 = vsel %vm208, %v209, 0
  %v212 = vand.u32 %v172, %v210
  %214 = vmatprep.subr.bf16.mxu0 0
  %215 = vmatpush1.bf16.msra.mxu0 %v170
  %216 = vmatprep.subr.bf16.mxu0 0
  %217 = vmatpush1.bf16.msra.mxu0 %v169
  %218 = vmatprep.subr.bf16.mxu0 0
  %219 = vmatpush1.bf16.msra.mxu0 %v168
  %220 = vmatprep.subr.bf16.mxu0 0
  %221 = vmatpush1.bf16.msra.mxu0 %v167
  %222 = vmatprep.subr.bf16.mxu0 0
  %223 = vmatpush1.bf16.msra.mxu0 %v166
  %224 = vmatprep.subr.bf16.mxu0 0
  %225 = vmatpush1.bf16.msra.mxu0 %v165
  %226 = vmatprep.subr.bf16.mxu0 0
  %227 = vmatpush1.bf16.msra.mxu0 %v164
  %228 = vmatprep.subr.bf16.mxu0 0
  %229 = vmatpush1.bf16.msra.mxu0 %v163
  %230 = vmatprep.subr.bf16.mxu0 0
  %231 = vmatpush2.bf16.msra.mxu0 0
  %232 = vmatprep.subr.bf16.mxu0 0
  %233 = vmatpush2.bf16.msra.mxu0 0
  %234 = vmatprep.subr.bf16.mxu0 0
  %235 = vmatpush2.bf16.msra.mxu0 0
  %236 = vmatprep.subr.bf16.mxu0 0
  %237 = vmatpush2.bf16.msra.mxu0 0
  %238 = vmatprep.subr.bf16.mxu0 0
  %239 = vmatpush2.bf16.msra.mxu0 0
  %240 = vmatprep.subr.bf16.mxu0 0
  %241 = vmatpush2.bf16.msra.mxu0 0
  %242 = vmatprep.subr.bf16.mxu0 0
  %243 = vmatpush2.bf16.msra.mxu0 %v212
  %244 = vmatprep.subr.bf16.mxu0 0
  %245 = vmatpush2.bf16.msra.mxu0 %v171
  %246 = vmatprep.mubr.bf16.mxu0 %v184
  %247 = vmatmul.mubr.bf16.gmra.mxu0 %v101
  %v248 = vpop.f32.mrf.mxu0
  %v249 = vadd.f32 0.0, %v248
  %v250 = vpop.f32.mrf.mxu0
  %v251 = vpop.f32.mrf.mxu0
  %v252 = vadd.f32 0.0, %v251
  %v253 = vpop.f32.mrf.mxu0
  %254 = vmatprep.mubr.bf16.mxu0 %v187
  %255 = vmatmul.mubr.bf16.gmra.mxu0 %v103
  %v256 = vpop.f32.mrf.mxu0
  %v257 = vadd.f32 0.0, %v256
  %v258 = vpop.f32.mrf.mxu0
  %v259 = vpop.f32.mrf.mxu0
  %v260 = vadd.f32 0.0, %v259
  %v261 = vpop.f32.mrf.mxu0
  %262 = vmatprep.mubr.bf16.mxu0 %v190
  %263 = vmatmul.mubr.bf16.gmra.mxu0 %v105
  %v264 = vpop.f32.mrf.mxu0
  %v265 = vadd.f32 0.0, %v264
  %v266 = vpop.f32.mrf.mxu0
  %v267 = vpop.f32.mrf.mxu0
  %v268 = vadd.f32 0.0, %v267
  %v269 = vpop.f32.mrf.mxu0
  %270 = vmatprep.mubr.bf16.mxu0 %v193
  %271 = vmatmul.mubr.bf16.gmra.mxu0 %v107
  %v272 = vpop.f32.mrf.mxu0
  %v273 = vadd.f32 0.0, %v272
  %v274 = vpop.f32.mrf.mxu0
  %v275 = vpop.f32.mrf.mxu0
  %v276 = vadd.f32 0.0, %v275
  %v277 = vpop.f32.mrf.mxu0
  %278 = vmatprep.mubr.bf16.mxu0 %v196
  %279 = vmatmul.mubr.bf16.gmra.mxu0 %v109
  %v280 = vpop.f32.mrf.mxu0
  %v281 = vadd.f32 0.0, %v280
  %v282 = vpop.f32.mrf.mxu0
  %v283 = vpop.f32.mrf.mxu0
  %v284 = vadd.f32 0.0, %v283
  %v285 = vpop.f32.mrf.mxu0
  %286 = vmatprep.mubr.bf16.mxu0 %v199
  %287 = vmatmul.mubr.bf16.gmra.mxu0 %v111
  %v288 = vpop.f32.mrf.mxu0
  %v289 = vadd.f32 0.0, %v288
  %v290 = vpop.f32.mrf.mxu0
  %v291 = vpop.f32.mrf.mxu0
  %v292 = vadd.f32 0.0, %v291
  %v293 = vpop.f32.mrf.mxu0
  %294 = vmatprep.mubr.bf16.mxu0 %v202
  %295 = vmatmul.mubr.bf16.gmra.mxu0 %v113
  %v296 = vpop.f32.mrf.mxu0
  %v297 = vadd.f32 0.0, %v296
  %v298 = vpop.f32.mrf.mxu0
  %v299 = vpop.f32.mrf.mxu0
  %v300 = vadd.f32 0.0, %v299
  %v301 = vpop.f32.mrf.mxu0
  %302 = vmatprep.mubr.bf16.mxu0 %v205
  %303 = vmatmul.mubr.bf16.gmra.mxu0 %v115
  %v304 = vpop.f32.mrf.mxu0
  %v305 = vadd.f32 0.0, %v304
  %v306 = vpop.f32.mrf.mxu0
  %v307 = vpop.f32.mrf.mxu0
  %v308 = vadd.f32 0.0, %v307
  %v309 = vpop.f32.mrf.mxu0
  %310 = vdwg.mxu0
  %v311 = vld [vmem:[%s2] sm:$0x1]
  %v313 = vlaneseq
  %v314 = vshrl.u32 %v313, 7
  %v315 = vsub.s32 0, %v314
  %v316 = vrot.slane %v311, %v315
  %v318 = vmul.f32 %v249, %v316
  %v319 = vmul.f32 %v252, %v316
  %v320 = vmul.f32 %v257, %v316
  %v321 = vmul.f32 %v260, %v316
  %v322 = vmul.f32 %v265, %v316
  %v323 = vmul.f32 %v268, %v316
  %v324 = vmul.f32 %v273, %v316
  %v325 = vmul.f32 %v276, %v316
  %v326 = vmul.f32 %v281, %v316
  %v327 = vmul.f32 %v284, %v316
  %v328 = vmul.f32 %v289, %v316
  %v329 = vmul.f32 %v292, %v316
  %v330 = vmul.f32 %v297, %v316
  %v331 = vmul.f32 %v300, %v316
  %v332 = vmul.f32 %v305, %v316
  %v333 = vmul.f32 %v308, %v316
  %v334 = vld [vmem:[%s3] sm:$0x1]
  %v336 = vlaneseq
  %v337 = vshrl.u32 %v336, 7
  %v338 = vsub.s32 0, %v337
  %v339 = vrot.slane %v334, %v338
  %v341 = vadd.f32 %v318, %v339
  %v342 = vadd.f32 %v319, %v339
  %v343 = vadd.f32 %v320, %v339
  %v344 = vadd.f32 %v321, %v339
  %v345 = vadd.f32 %v322, %v339
  %v346 = vadd.f32 %v323, %v339
  %v347 = vadd.f32 %v324, %v339
  %v348 = vadd.f32 %v325, %v339
  %v349 = vadd.f32 %v326, %v339
  %v350 = vadd.f32 %v327, %v339
  %v351 = vadd.f32 %v328, %v339
  %v352 = vadd.f32 %v329, %v339
  %v353 = vadd.f32 %v330, %v339
  %v354 = vadd.f32 %v331, %v339
  %v355 = vadd.f32 %v332, %v339
  %v356 = vadd.f32 %v333, %v339
  %v357 = vmax.f32 %v341, 0.0
  %v358 = vmax.f32 %v342, 0.0
  %v359 = vmax.f32 %v343, 0.0
  %v360 = vmax.f32 %v344, 0.0
  %v361 = vmax.f32 %v345, 0.0
  %v362 = vmax.f32 %v346, 0.0
  %v363 = vmax.f32 %v347, 0.0
  %v364 = vmax.f32 %v348, 0.0
  %v365 = vmax.f32 %v349, 0.0
  %v366 = vmax.f32 %v350, 0.0
  %v367 = vmax.f32 %v351, 0.0
  %v368 = vmax.f32 %v352, 0.0
  %v369 = vmax.f32 %v353, 0.0
  %v370 = vmax.f32 %v354, 0.0
  %v371 = vmax.f32 %v355, 0.0
  %v372 = vmax.f32 %v356, 0.0
  %v373 = vpack.c.bf16 %v358, %v357
  %v374 = vpack.c.bf16 %v360, %v359
  %v375 = vpack.c.bf16 %v362, %v361
  %v376 = vpack.c.bf16 %v364, %v363
  %v377 = vpack.c.bf16 %v366, %v365
  %v378 = vpack.c.bf16 %v368, %v367
  %v379 = vpack.c.bf16 %v370, %v369
  %v380 = vpack.c.bf16 %v372, %v371
  %v389 = vunpack.c.l.b16 %v373
  %v390 = vunpack.c.h.b16 %v373
  %v391 = vunpack.c.l.b16 %v374
  %v392 = vunpack.c.h.b16 %v374
  %v393 = vunpack.c.l.b16 %v375
  %v394 = vunpack.c.h.b16 %v375
  %v395 = vunpack.c.l.b16 %v376
  %v396 = vunpack.c.h.b16 %v376
  %v397 = vunpack.c.l.b16 %v377
  %v398 = vunpack.c.h.b16 %v377
  %v399 = vunpack.c.l.b16 %v378
  %v400 = vunpack.c.h.b16 %v378
  %v401 = vunpack.c.l.b16 %v379
  %v402 = vunpack.c.h.b16 %v379
  %v403 = vunpack.c.l.b16 %v380
  %v404 = vunpack.c.h.b16 %v380
  %v405 = vpack.c.b16 %v389, %v389
  %v406 = vpack.c.b16 %v390, %v390
  %v407 = vpack.c.b16 %v391, %v391
  %v408 = vpack.c.b16 %v392, %v392
  %v409 = vpack.c.b16 %v393, %v393
  %v410 = vpack.c.b16 %v394, %v394
  %v411 = vpack.c.b16 %v395, %v395
  %v412 = vpack.c.b16 %v396, %v396
  %v413 = vpack.c.b16 %v397, %v397
  %v414 = vpack.c.b16 %v398, %v398
  %v415 = vpack.c.b16 %v399, %v399
  %v416 = vpack.c.b16 %v400, %v400
  %v417 = vpack.c.b16 %v401, %v401
  %v418 = vpack.c.b16 %v402, %v402
  %v419 = vpack.c.b16 %v403, %v403
  %v420 = vpack.c.b16 %v404, %v404
  %437 = vst [vmem:[%s4] sm:$0xf] %v405
  %438 = vst [vmem:[%s4 + $0x4] sm:$0xf] %v406
  %439 = vst [vmem:[%s4 + $0x8] sm:$0xf] %v407
  %440 = vst [vmem:[%s4 + $0xc] sm:$0xf] %v408
  %441 = vst [vmem:[%s4 + $0x10] sm:$0xf] %v409
  %442 = vst [vmem:[%s4 + $0x14] sm:$0xf] %v410
  %443 = vst [vmem:[%s4 + $0x18] sm:$0xf] %v411
  %444 = vst [vmem:[%s4 + $0x1c] sm:$0xf] %v412
  %445 = vst [vmem:[%s4 + $0x20] sm:$0xf] %v413
  %446 = vst [vmem:[%s4 + $0x24] sm:$0xf] %v414
  %447 = vst [vmem:[%s4 + $0x28] sm:$0xf] %v415
  %448 = vst [vmem:[%s4 + $0x2c] sm:$0xf] %v416
  %449 = vst [vmem:[%s4 + $0x30] sm:$0xf] %v417
  %450 = vst [vmem:[%s4 + $0x34] sm:$0xf] %v418
  %451 = vst [vmem:[%s4 + $0x38] sm:$0xf] %v419
  %452 = vst [vmem:[%s4 + $0x3c] sm:$0xf] %v420
  // Predicated region
  $region18: #{superpixel_tokenizer_forward.3} parent=0 // pred_check
    _
  $region19: #{superpixel_tokenizer_forward.3} parent=0 // pred_check_branch
    %454 = sbr.rel (0) target = $region21
  $region20: #{superpixel_tokenizer_forward.3} parent=0 // pred_region
    _
  $region21: #{superpixel_tokenizer_forward.3} parent=0 // pred_fallthru
    _
  // Predicated region
  $region22: #{superpixel_tokenizer_forward.3} parent=0 // pred_check
    _
  $region23: #{superpixel_tokenizer_forward.3} parent=0 // pred_check_branch
    %456 = sbr.rel (0) target = $region25
  $region24: #{superpixel_tokenizer_forward.3} parent=0 // pred_region
    _
  $region25: #{superpixel_tokenizer_forward.3} parent=0 // pred_fallthru
    _

// kernel: superpixel_tokenizer_forward.4
$region0: #{superpixel_tokenizer_forward.4}
  #allocation0 [shape = 'u32[]', space=smem, size = 0x4, offset = 0x4, fixed_abs, tag = 'smem constant byte address 0x4 - core index']
  #allocation1 [shape = 'u32[144,128]{1,0:T(1,128)}', space=vmem, size = 0x12000, scoped, tag = 'internal scratch']
  %s0 = inlined_call_operand.vmem [shape: bf16[32,1152], index: 0, kind: input, shape index: {}]
  %s1 = inlined_call_operand.vmem [shape: bf16[1152,128], index: 1, kind: input, shape index: {}]
  %s2 = inlined_call_operand.vmem [shape: f32[1,128], index: 2, kind: input, shape index: {}]
  %s3 = inlined_call_operand.vmem [shape: f32[1,128], index: 3, kind: input, shape index: {}]
  %s4 = inlined_call_operand.vmem [shape: bf16[32,128], index: 4, kind: output, shape index: {}]
  %s5 = sld [smem:[#allocation0]]
  $region26: #{superpixel_tokenizer_forward.4} parent=0
    _
  %s7 = ssub.s32 1, %s5
  %s8 = scalar_select 0, %s7, %s5
  // Predicated region
  $region2: #{superpixel_tokenizer_forward.4} parent=0 // pred_check
    _
  $region3: #{superpixel_tokenizer_forward.4} parent=0 // pred_check_branch
    %10 = sbr.rel (0) target = $region5
  $region4: #{superpixel_tokenizer_forward.4} parent=0 // pred_region
    _
  $region5: #{superpixel_tokenizer_forward.4} parent=0 // pred_fallthru
    _
  // Predicated region
  $region6: #{superpixel_tokenizer_forward.4} parent=0 // pred_check
    _
  $region7: #{superpixel_tokenizer_forward.4} parent=0 // pred_check_branch
    %12 = sbr.rel (0) target = $region9
  $region8: #{superpixel_tokenizer_forward.4} parent=0 // pred_region
    _
  $region9: #{superpixel_tokenizer_forward.4} parent=0 // pred_fallthru
    _
  // Predicated region
  $region10: #{superpixel_tokenizer_forward.4} parent=0 // pred_check
    _
  $region11: #{superpixel_tokenizer_forward.4} parent=0 // pred_check_branch
    %14 = sbr.rel (0) target = $region13
  $region12: #{superpixel_tokenizer_forward.4} parent=0 // pred_region
    _
  $region13: #{superpixel_tokenizer_forward.4} parent=0 // pred_fallthru
    _
  // Predicated region
  $region14: #{superpixel_tokenizer_forward.4} parent=0 // pred_check
    _
  $region15: #{superpixel_tokenizer_forward.4} parent=0 // pred_check_branch
    %16 = sbr.rel (0) target = $region17
  $region16: #{superpixel_tokenizer_forward.4} parent=0 // pred_region
    _
  $region17: #{superpixel_tokenizer_forward.4} parent=0 // pred_fallthru
    _
  %v18 = vld [vmem:[%s0] sm:$0xff]
  %v19 = vld [vmem:[%s0 + $0x8] sm:$0xff]
  %v20 = vld [vmem:[%s0 + $0x10] sm:$0xff]
  %v21 = vld [vmem:[%s0 + $0x18] sm:$0xff]
  %v22 = vld [vmem:[%s0 + $0x20] sm:$0xf]
  %v23 = vld [vmem:[%s0 + $0x24] sm:$0xff]
  %v24 = vld [vmem:[%s0 + $0x2c] sm:$0xff]
  %v25 = vld [vmem:[%s0 + $0x34] sm:$0xff]
  %v26 = vld [vmem:[%s0 + $0x3c] sm:$0xff]
  %v27 = vld [vmem:[%s0 + $0x44] sm:$0xf]
  %v28 = vld [vmem:[%s0 + $0x48] sm:$0xff]
  %v29 = vld [vmem:[%s0 + $0x50] sm:$0xff]
  %v30 = vld [vmem:[%s0 + $0x58] sm:$0xff]
  %v31 = vld [vmem:[%s0 + $0x60] sm:$0xff]
  %v32 = vld [vmem:[%s0 + $0x68] sm:$0xf]
  %v33 = vld [vmem:[%s0 + $0x6c] sm:$0xff]
  %v34 = vld [vmem:[%s0 + $0x74] sm:$0xff]
  %v35 = vld [vmem:[%s0 + $0x7c] sm:$0xff]
  %v36 = vld [vmem:[%s0 + $0x84] sm:$0xff]
  %v37 = vld [vmem:[%s0 + $0x8c] sm:$0xf]
  %v38 = vld [vmem:[%s1] sm:$0xf]
  %v39 = vld [vmem:[%s1 + $0x4] sm:$0xf]
  %v40 = vld [vmem:[%s1 + $0x8] sm:$0xf]
  %v41 = vld [vmem:[%s1 + $0xc] sm:$0xf]
  %v42 = vld [vmem:[%s1 + $0x10] sm:$0xf]
  %v43 = vld [vmem:[%s1 + $0x14] sm:$0xf]
  %v44 = vld [vmem:[%s1 + $0x18] sm:$0xf]
  %v45 = vld [vmem:[%s1 + $0x1c] sm:$0xf]
  %v46 = vld [vmem:[%s1 + $0x20] sm:$0xf]
  %v47 = vld [vmem:[%s1 + $0x24] sm:$0xf]
  %v48 = vld [vmem:[%s1 + $0x28] sm:$0xf]
  %v49 = vld [vmem:[%s1 + $0x2c] sm:$0xf]
  %v50 = vld [vmem:[%s1 + $0x30] sm:$0xf]
  %v51 = vld [vmem:[%s1 + $0x34] sm:$0xf]
  %v52 = vld [vmem:[%s1 + $0x38] sm:$0xf]
  %v53 = vld [vmem:[%s1 + $0x3c] sm:$0xf]
  %v54 = vld [vmem:[%s1 + $0x40] sm:$0xf]
  %v55 = vld [vmem:[%s1 + $0x44] sm:$0xf]
  %v56 = vld [vmem:[%s1 + $0x48] sm:$0xf]
  %v57 = vld [vmem:[%s1 + $0x4c] sm:$0xf]
  %v58 = vld [vmem:[%s1 + $0x50] sm:$0xf]
  %v59 = vld [vmem:[%s1 + $0x54] sm:$0xf]
  %v60 = vld [vmem:[%s1 + $0x58] sm:$0xf]
  %v61 = vld [vmem:[%s1 + $0x5c] sm:$0xf]
  %v62 = vld [vmem:[%s1 + $0x60] sm:$0xf]
  %v63 = vld [vmem:[%s1 + $0x64] sm:$0xf]
  %v64 = vld [vmem:[%s1 + $0x68] sm:$0xf]
  %v65 = vld [vmem:[%s1 + $0x6c] sm:$0xf]
  %v66 = vld [vmem:[%s1 + $0x70] sm:$0xf]
  %v67 = vld [vmem:[%s1 + $0x74] sm:$0xf]
  %v68 = vld [vmem:[%s1 + $0x78] sm:$0xf]
  %v69 = vld [vmem:[%s1 + $0x7c] sm:$0xf]
  %v70 = vld [vmem:[%s1 + $0x80] sm:$0xf]
  %v71 = vld [vmem:[%s1 + $0x84] sm:$0xf]
  %v72 = vld [vmem:[%s1 + $0x88] sm:$0xf]
  %v73 = vld [vmem:[%s1 + $0x8c] sm:$0xf]
  %v74 = vld [vmem:[%s1 + $0x90] sm:$0xf]
  %v75 = vld [vmem:[%s1 + $0x94] sm:$0xf]
  %v76 = vld [vmem:[%s1 + $0x98] sm:$0xf]
  %v77 = vld [vmem:[%s1 + $0x9c] sm:$0xf]
  %v78 = vld [vmem:[%s1 + $0xa0] sm:$0xf]
  %v79 = vld [vmem:[%s1 + $0xa4] sm:$0xf]
  %v80 = vld [vmem:[%s1 + $0xa8] sm:$0xf]
  %v81 = vld [vmem:[%s1 + $0xac] sm:$0xf]
  %v82 = vld [vmem:[%s1 + $0xb0] sm:$0xf]
  %v83 = vld [vmem:[%s1 + $0xb4] sm:$0xf]
  %v84 = vld [vmem:[%s1 + $0xb8] sm:$0xf]
  %v85 = vld [vmem:[%s1 + $0xbc] sm:$0xf]
  %v86 = vld [vmem:[%s1 + $0xc0] sm:$0xf]
  %v87 = vld [vmem:[%s1 + $0xc4] sm:$0xf]
  %v88 = vld [vmem:[%s1 + $0xc8] sm:$0xf]
  %v89 = vld [vmem:[%s1 + $0xcc] sm:$0xf]
  %v90 = vld [vmem:[%s1 + $0xd0] sm:$0xf]
  %v91 = vld [vmem:[%s1 + $0xd4] sm:$0xf]
  %v92 = vld [vmem:[%s1 + $0xd8] sm:$0xf]
  %v93 = vld [vmem:[%s1 + $0xdc] sm:$0xf]
  %v94 = vld [vmem:[%s1 + $0xe0] sm:$0xf]
  %v95 = vld [vmem:[%s1 + $0xe4] sm:$0xf]
  %v96 = vld [vmem:[%s1 + $0xe8] sm:$0xf]
  %v97 = vld [vmem:[%s1 + $0xec] sm:$0xf]
  %v98 = vld [vmem:[%s1 + $0xf0] sm:$0xf]
  %v99 = vld [vmem:[%s1 + $0xf4] sm:$0xf]
  %v100 = vld [vmem:[%s1 + $0xf8] sm:$0xf]
  %v101 = vld [vmem:[%s1 + $0xfc] sm:$0xf]
  %v102 = vld [vmem:[%s1 + $0x100] sm:$0xf]
  %v103 = vld [vmem:[%s1 + $0x104] sm:$0xf]
  %v104 = vld [vmem:[%s1 + $0x108] sm:$0xf]
  %v105 = vld [vmem:[%s1 + $0x10c] sm:$0xf]
  %v106 = vld [vmem:[%s1 + $0x110] sm:$0xf]
  %v107 = vld [vmem:[%s1 + $0x114] sm:$0xf]
  %v108 = vld [vmem:[%s1 + $0x118] sm:$0xf]
  %v109 = vld [vmem:[%s1 + $0x11c] sm:$0xf]
  %v110 = vld [vmem:[%s1 + $0x120] sm:$0xf]
  %v111 = vld [vmem:[%s1 + $0x124] sm:$0xf]
  %v112 = vld [vmem:[%s1 + $0x128] sm:$0xf]
  %v113 = vld [vmem:[%s1 + $0x12c] sm:$0xf]
  %v114 = vld [vmem:[%s1 + $0x130] sm:$0xf]
  %v115 = vld [vmem:[%s1 + $0x134] sm:$0xf]
  %v116 = vld [vmem:[%s1 + $0x138] sm:$0xf]
  %v117 = vld [vmem:[%s1 + $0x13c] sm:$0xf]
  %v118 = vld [vmem:[%s1 + $0x140] sm:$0xf]
  %v119 = vld [vmem:[%s1 + $0x144] sm:$0xf]
  %v120 = vld [vmem:[%s1 + $0x148] sm:$0xf]
  %v121 = vld [vmem:[%s1 + $0x14c] sm:$0xf]
  %v122 = vld [vmem:[%s1 + $0x150] sm:$0xf]
  %v123 = vld [vmem:[%s1 + $0x154] sm:$0xf]
  %v124 = vld [vmem:[%s1 + $0x158] sm:$0xf]
  %v125 = vld [vmem:[%s1 + $0x15c] sm:$0xf]
  %v126 = vld [vmem:[%s1 + $0x160] sm:$0xf]
  %v127 = vld [vmem:[%s1 + $0x164] sm:$0xf]
  %v128 = vld [vmem:[%s1 + $0x168] sm:$0xf]
  %v129 = vld [vmem:[%s1 + $0x16c] sm:$0xf]
  %v130 = vld [vmem:[%s1 + $0x170] sm:$0xf]
  %v131 = vld [vmem:[%s1 + $0x174] sm:$0xf]
  %v132 = vld [vmem:[%s1 + $0x178] sm:$0xf]
  %v133 = vld [vmem:[%s1 + $0x17c] sm:$0xf]
  %v134 = vld [vmem:[%s1 + $0x180] sm:$0xf]
  %v135 = vld [vmem:[%s1 + $0x184] sm:$0xf]
  %v136 = vld [vmem:[%s1 + $0x188] sm:$0xf]
  %v137 = vld [vmem:[%s1 + $0x18c] sm:$0xf]
  %v138 = vld [vmem:[%s1 + $0x190] sm:$0xf]
  %v139 = vld [vmem:[%s1 + $0x194] sm:$0xf]
  %v140 = vld [vmem:[%s1 + $0x198] sm:$0xf]
  %v141 = vld [vmem:[%s1 + $0x19c] sm:$0xf]
  %v142 = vld [vmem:[%s1 + $0x1a0] sm:$0xf]
  %v143 = vld [vmem:[%s1 + $0x1a4] sm:$0xf]
  %v144 = vld [vmem:[%s1 + $0x1a8] sm:$0xf]
  %v145 = vld [vmem:[%s1 + $0x1ac] sm:$0xf]
  %v146 = vld [vmem:[%s1 + $0x1b0] sm:$0xf]
  %v147 = vld [vmem:[%s1 + $0x1b4] sm:$0xf]
  %v148 = vld [vmem:[%s1 + $0x1b8] sm:$0xf]
  %v149 = vld [vmem:[%s1 + $0x1bc] sm:$0xf]
  %v150 = vld [vmem:[%s1 + $0x1c0] sm:$0xf]
  %v151 = vld [vmem:[%s1 + $0x1c4] sm:$0xf]
  %v152 = vld [vmem:[%s1 + $0x1c8] sm:$0xf]
  %v153 = vld [vmem:[%s1 + $0x1cc] sm:$0xf]
  %v154 = vld [vmem:[%s1 + $0x1d0] sm:$0xf]
  %v155 = vld [vmem:[%s1 + $0x1d4] sm:$0xf]
  %v156 = vld [vmem:[%s1 + $0x1d8] sm:$0xf]
  %v157 = vld [vmem:[%s1 + $0x1dc] sm:$0xf]
  %v158 = vld [vmem:[%s1 + $0x1e0] sm:$0xf]
  %v159 = vld [vmem:[%s1 + $0x1e4] sm:$0xf]
  %v160 = vld [vmem:[%s1 + $0x1e8] sm:$0xf]
  %v161 = vld [vmem:[%s1 + $0x1ec] sm:$0xf]
  %v162 = vld [vmem:[%s1 + $0x1f0] sm:$0xf]
  %v163 = vld [vmem:[%s1 + $0x1f4] sm:$0xf]
  %v164 = vld [vmem:[%s1 + $0x1f8] sm:$0xf]
  %v165 = vld [vmem:[%s1 + $0x1fc] sm:$0xf]
  %v166 = vld [vmem:[%s1 + $0x200] sm:$0xf]
  %v167 = vld [vmem:[%s1 + $0x204] sm:$0xf]
  %v168 = vld [vmem:[%s1 + $0x208] sm:$0xf]
  %v169 = vld [vmem:[%s1 + $0x20c] sm:$0xf]
  %v170 = vld [vmem:[%s1 + $0x210] sm:$0xf]
  %v171 = vld [vmem:[%s1 + $0x214] sm:$0xf]
  %v172 = vld [vmem:[%s1 + $0x218] sm:$0xf]
  %v173 = vld [vmem:[%s1 + $0x21c] sm:$0xf]
  %v174 = vld [vmem:[%s1 + $0x220] sm:$0xf]
  %v175 = vld [vmem:[%s1 + $0x224] sm:$0xf]
  %v176 = vld [vmem:[%s1 + $0x228] sm:$0xf]
  %v177 = vld [vmem:[%s1 + $0x22c] sm:$0xf]
  %v178 = vld [vmem:[%s1 + $0x230] sm:$0xf]
  %v179 = vld [vmem:[%s1 + $0x234] sm:$0xf]
  %v180 = vld [vmem:[%s1 + $0x238] sm:$0xf]
  %v181 = vld [vmem:[%s1 + $0x23c] sm:$0xf]
  %v202 = vunpack.c.l.b16 %v18
  %v203 = vunpack.c.h.b16 %v18
  %v204 = vunpack.c.l.b16 %v19
  %v205 = vunpack.c.h.b16 %v19
  %v206 = vunpack.c.l.b16 %v20
  %v207 = vunpack.c.h.b16 %v20
  %v208 = vunpack.c.l.b16 %v21
  %v209 = vunpack.c.h.b16 %v21
  %v210 = vunpack.c.l.b16 %v22
  %v211 = vunpack.c.l.b16 %v23
  %v212 = vunpack.c.h.b16 %v23
  %v213 = vunpack.c.l.b16 %v24
  %v214 = vunpack.c.h.b16 %v24
  %v215 = vunpack.c.l.b16 %v25
  %v216 = vunpack.c.h.b16 %v25
  %v217 = vunpack.c.l.b16 %v26
  %v218 = vunpack.c.h.b16 %v26
  %v219 = vunpack.c.l.b16 %v27
  %v220 = vunpack.c.l.b16 %v28
  %v221 = vunpack.c.h.b16 %v28
  %v222 = vunpack.c.l.b16 %v29
  %v223 = vunpack.c.h.b16 %v29
  %v224 = vunpack.c.l.b16 %v30
  %v225 = vunpack.c.h.b16 %v30
  %v226 = vunpack.c.l.b16 %v31
  %v227 = vunpack.c.h.b16 %v31
  %v228 = vunpack.c.l.b16 %v32
  %v229 = vunpack.c.l.b16 %v33
  %v230 = vunpack.c.h.b16 %v33
  %v231 = vunpack.c.l.b16 %v34
  %v232 = vunpack.c.h.b16 %v34
  %v233 = vunpack.c.l.b16 %v35
  %v234 = vunpack.c.h.b16 %v35
  %v235 = vunpack.c.l.b16 %v36
  %v236 = vunpack.c.h.b16 %v36
  %v237 = vunpack.c.l.b16 %v37
  %v238 = vpack.c.b16 %v211, %v202
  %v239 = vpack.c.b16 %v212, %v203
  %v240 = vpack.c.b16 %v213, %v204
  %v241 = vpack.c.b16 %v214, %v205
  %v242 = vpack.c.b16 %v215, %v206
  %v243 = vpack.c.b16 %v216, %v207
  %v244 = vpack.c.b16 %v217, %v208
  %v245 = vpack.c.b16 %v218, %v209
  %v246 = vpack.c.b16 %v219, %v210
  %v247 = vpack.c.b16 %v229, %v220
  %v248 = vpack.c.b16 %v230, %v221
  %v249 = vpack.c.b16 %v231, %v222
  %v250 = vpack.c.b16 %v232, %v223
  %v251 = vpack.c.b16 %v233, %v224
  %v252 = vpack.c.b16 %v234, %v225
  %v253 = vpack.c.b16 %v235, %v226
  %v254 = vpack.c.b16 %v236, %v227
  %v255 = vpack.c.b16 %v237, %v228
  %v418 = vunpack.c.l.b16 %v38
  %v419 = vunpack.c.l.b16 %v39
  %v420 = vunpack.c.l.b16 %v40
  %v421 = vunpack.c.l.b16 %v41
  %v422 = vunpack.c.l.b16 %v42
  %v423 = vunpack.c.l.b16 %v43
  %v424 = vunpack.c.l.b16 %v44
  %v425 = vunpack.c.l.b16 %v45
  %v426 = vunpack.c.l.b16 %v46
  %v427 = vunpack.c.l.b16 %v47
  %v428 = vunpack.c.l.b16 %v48
  %v429 = vunpack.c.l.b16 %v49
  %v430 = vunpack.c.l.b16 %v50
  %v431 = vunpack.c.l.b16 %v51
  %v432 = vunpack.c.l.b16 %v52
  %v433 = vunpack.c.l.b16 %v53
  %v434 = vunpack.c.l.b16 %v54
  %v435 = vunpack.c.l.b16 %v55
  %v436 = vunpack.c.l.b16 %v56
  %v437 = vunpack.c.l.b16 %v57
  %v438 = vunpack.c.l.b16 %v58
  %v439 = vunpack.c.l.b16 %v59
  %v440 = vunpack.c.l.b16 %v60
  %v441 = vunpack.c.l.b16 %v61
  %v442 = vunpack.c.l.b16 %v62
  %v443 = vunpack.c.l.b16 %v63
  %v444 = vunpack.c.l.b16 %v64
  %v445 = vunpack.c.l.b16 %v65
  %v446 = vunpack.c.l.b16 %v66
  %v447 = vunpack.c.l.b16 %v67
  %v448 = vunpack.c.l.b16 %v68
  %v449 = vunpack.c.l.b16 %v69
  %v450 = vunpack.c.l.b16 %v70
  %v451 = vunpack.c.l.b16 %v71
  %v452 = vunpack.c.l.b16 %v72
  %v453 = vunpack.c.l.b16 %v73
  %v454 = vunpack.c.l.b16 %v74
  %v455 = vunpack.c.l.b16 %v75
  %v456 = vunpack.c.l.b16 %v76
  %v457 = vunpack.c.l.b16 %v77
  %v458 = vunpack.c.l.b16 %v78
  %v459 = vunpack.c.l.b16 %v79
  %v460 = vunpack.c.l.b16 %v80
  %v461 = vunpack.c.l.b16 %v81
  %v462 = vunpack.c.l.b16 %v82
  %v463 = vunpack.c.l.b16 %v83
  %v464 = vunpack.c.l.b16 %v84
  %v465 = vunpack.c.l.b16 %v85
  %v466 = vunpack.c.l.b16 %v86
  %v467 = vunpack.c.l.b16 %v87
  %v468 = vunpack.c.l.b16 %v88
  %v469 = vunpack.c.l.b16 %v89
  %v470 = vunpack.c.l.b16 %v90
  %v471 = vunpack.c.l.b16 %v91
  %v472 = vunpack.c.l.b16 %v92
  %v473 = vunpack.c.l.b16 %v93
  %v474 = vunpack.c.l.b16 %v94
  %v475 = vunpack.c.l.b16 %v95
  %v476 = vunpack.c.l.b16 %v96
  %v477 = vunpack.c.l.b16 %v97
  %v478 = vunpack.c.l.b16 %v98
  %v479 = vunpack.c.l.b16 %v99
  %v480 = vunpack.c.l.b16 %v100
  %v481 = vunpack.c.l.b16 %v101
  %v482 = vunpack.c.l.b16 %v102
  %v483 = vunpack.c.l.b16 %v103
  %v484 = vunpack.c.l.b16 %v104
  %v485 = vunpack.c.l.b16 %v105
  %v486 = vunpack.c.l.b16 %v106
  %v487 = vunpack.c.l.b16 %v107
  %v488 = vunpack.c.l.b16 %v108
  %v489 = vunpack.c.l.b16 %v109
  %v490 = vunpack.c.l.b16 %v110
  %v491 = vunpack.c.l.b16 %v111
  %v492 = vunpack.c.l.b16 %v112
  %v493 = vunpack.c.l.b16 %v113
  %v494 = vunpack.c.l.b16 %v114
  %v495 = vunpack.c.l.b16 %v115
  %v496 = vunpack.c.l.b16 %v116
  %v497 = vunpack.c.l.b16 %v117
  %v498 = vunpack.c.l.b16 %v118
  %v499 = vunpack.c.l.b16 %v119
  %v500 = vunpack.c.l.b16 %v120
  %v501 = vunpack.c.l.b16 %v121
  %v502 = vunpack.c.l.b16 %v122
  %v503 = vunpack.c.l.b16 %v123
  %v504 = vunpack.c.l.b16 %v124
  %v505 = vunpack.c.l.b16 %v125
  %v506 = vunpack.c.l.b16 %v126
  %v507 = vunpack.c.l.b16 %v127
  %v508 = vunpack.c.l.b16 %v128
  %v509 = vunpack.c.l.b16 %v129
  %v510 = vunpack.c.l.b16 %v130
  %v511 = vunpack.c.l.b16 %v131
  %v512 = vunpack.c.l.b16 %v132
  %v513 = vunpack.c.l.b16 %v133
  %v514 = vunpack.c.l.b16 %v134
  %v515 = vunpack.c.l.b16 %v135
  %v516 = vunpack.c.l.b16 %v136
  %v517 = vunpack.c.l.b16 %v137
  %v518 = vunpack.c.l.b16 %v138
  %v519 = vunpack.c.l.b16 %v139
  %v520 = vunpack.c.l.b16 %v140
  %v521 = vunpack.c.l.b16 %v141
  %v522 = vunpack.c.l.b16 %v142
  %v523 = vunpack.c.l.b16 %v143
  %v524 = vunpack.c.l.b16 %v144
  %v525 = vunpack.c.l.b16 %v145
  %v526 = vunpack.c.l.b16 %v146
  %v527 = vunpack.c.l.b16 %v147
  %v528 = vunpack.c.l.b16 %v148
  %v529 = vunpack.c.l.b16 %v149
  %v530 = vunpack.c.l.b16 %v150
  %v531 = vunpack.c.l.b16 %v151
  %v532 = vunpack.c.l.b16 %v152
  %v533 = vunpack.c.l.b16 %v153
  %v534 = vunpack.c.l.b16 %v154
  %v535 = vunpack.c.l.b16 %v155
  %v536 = vunpack.c.l.b16 %v156
  %v537 = vunpack.c.l.b16 %v157
  %v538 = vunpack.c.l.b16 %v158
  %v539 = vunpack.c.l.b16 %v159
  %v540 = vunpack.c.l.b16 %v160
  %v541 = vunpack.c.l.b16 %v161
  %v542 = vunpack.c.l.b16 %v162
  %v543 = vunpack.c.l.b16 %v163
  %v544 = vunpack.c.l.b16 %v164
  %v545 = vunpack.c.l.b16 %v165
  %v546 = vunpack.c.l.b16 %v166
  %v547 = vunpack.c.l.b16 %v167
  %v548 = vunpack.c.l.b16 %v168
  %v549 = vunpack.c.l.b16 %v169
  %v550 = vunpack.c.l.b16 %v170
  %v551 = vunpack.c.l.b16 %v171
  %v552 = vunpack.c.l.b16 %v172
  %v553 = vunpack.c.l.b16 %v173
  %v554 = vunpack.c.l.b16 %v174
  %v555 = vunpack.c.l.b16 %v175
  %v556 = vunpack.c.l.b16 %v176
  %v557 = vunpack.c.l.b16 %v177
  %v558 = vunpack.c.l.b16 %v178
  %v559 = vunpack.c.l.b16 %v179
  %v560 = vunpack.c.l.b16 %v180
  %v561 = vunpack.c.l.b16 %v181
  %v562 = vpack.c.b16 %v419, %v418
  %v563 = vpack.c.b16 %v421, %v420
  %v564 = vpack.c.b16 %v423, %v422
  %v565 = vpack.c.b16 %v425, %v424
  %v566 = vpack.c.b16 %v427, %v426
  %v567 = vpack.c.b16 %v429, %v428
  %v568 = vpack.c.b16 %v431, %v430
  %v569 = vpack.c.b16 %v433, %v432
  %v570 = vpack.c.b16 %v435, %v434
  %v571 = vpack.c.b16 %v437, %v436
  %v572 = vpack.c.b16 %v439, %v438
  %v573 = vpack.c.b16 %v441, %v440
  %v574 = vpack.c.b16 %v443, %v442
  %v575 = vpack.c.b16 %v445, %v444
  %v576 = vpack.c.b16 %v447, %v446
  %v577 = vpack.c.b16 %v449, %v448
  %v578 = vpack.c.b16 %v451, %v450
  %v579 = vpack.c.b16 %v453, %v452
  %v580 = vpack.c.b16 %v455, %v454
  %v581 = vpack.c.b16 %v457, %v456
  %v582 = vpack.c.b16 %v459, %v458
  %v583 = vpack.c.b16 %v461, %v460
  %v584 = vpack.c.b16 %v463, %v462
  %v585 = vpack.c.b16 %v465, %v464
  %v586 = vpack.c.b16 %v467, %v466
  %v587 = vpack.c.b16 %v469, %v468
  %v588 = vpack.c.b16 %v471, %v470
  %v589 = vpack.c.b16 %v473, %v472
  %v590 = vpack.c.b16 %v475, %v474
  %v591 = vpack.c.b16 %v477, %v476
  %v592 = vpack.c.b16 %v479, %v478
  %v593 = vpack.c.b16 %v481, %v480
  %v594 = vpack.c.b16 %v483, %v482
  %v595 = vpack.c.b16 %v485, %v484
  %v596 = vpack.c.b16 %v487, %v486
  %v597 = vpack.c.b16 %v489, %v488
  %v598 = vpack.c.b16 %v491, %v490
  %v599 = vpack.c.b16 %v493, %v492
  %v600 = vpack.c.b16 %v495, %v494
  %v601 = vpack.c.b16 %v497, %v496
  %v602 = vpack.c.b16 %v499, %v498
  %v603 = vpack.c.b16 %v501, %v500
  %v604 = vpack.c.b16 %v503, %v502
  %v605 = vpack.c.b16 %v505, %v504
  %v606 = vpack.c.b16 %v507, %v506
  %v607 = vpack.c.b16 %v509, %v508
  %v608 = vpack.c.b16 %v511, %v510
  %v609 = vpack.c.b16 %v513, %v512
  %v610 = vpack.c.b16 %v515, %v514
  %v611 = vpack.c.b16 %v517, %v516
  %v612 = vpack.c.b16 %v519, %v518
  %v613 = vpack.c.b16 %v521, %v520
  %v614 = vpack.c.b16 %v523, %v522
  %v615 = vpack.c.b16 %v525, %v524
  %v616 = vpack.c.b16 %v527, %v526
  %v617 = vpack.c.b16 %v529, %v528
  %v618 = vpack.c.b16 %v531, %v530
  %v619 = vpack.c.b16 %v533, %v532
  %v620 = vpack.c.b16 %v535, %v534
  %v621 = vpack.c.b16 %v537, %v536
  %v622 = vpack.c.b16 %v539, %v538
  %v623 = vpack.c.b16 %v541, %v540
  %v624 = vpack.c.b16 %v543, %v542
  %v625 = vpack.c.b16 %v545, %v544
  %v626 = vpack.c.b16 %v547, %v546
  %v627 = vpack.c.b16 %v549, %v548
  %v628 = vpack.c.b16 %v551, %v550
  %v629 = vpack.c.b16 %v553, %v552
  %v630 = vpack.c.b16 %v555, %v554
  %v631 = vpack.c.b16 %v557, %v556
  %v632 = vpack.c.b16 %v559, %v558
  %v633 = vpack.c.b16 %v561, %v560
  %706 = vmatprep.subr.bf16.mxu0 0
  %707 = vmatpush1.bf16.msra.mxu0 %v569
  %708 = vmatprep.subr.bf16.mxu0 0
  %709 = vmatpush1.bf16.msra.mxu0 %v568
  %710 = vmatprep.subr.bf16.mxu0 0
  %711 = vmatpush1.bf16.msra.mxu0 %v567
  %712 = vmatprep.subr.bf16.mxu0 0
  %713 = vmatpush1.bf16.msra.mxu0 %v566
  %714 = vmatprep.subr.bf16.mxu0 0
  %715 = vmatpush1.bf16.msra.mxu0 %v565
  %716 = vmatprep.subr.bf16.mxu0 0
  %717 = vmatpush1.bf16.msra.mxu0 %v564
  %718 = vmatprep.subr.bf16.mxu0 0
  %719 = vmatpush1.bf16.msra.mxu0 %v563
  %720 = vmatprep.subr.bf16.mxu0 0
  %721 = vmatpush1.bf16.msra.mxu0 %v562
  %722 = vmatprep.subr.bf16.mxu0 0
  %723 = vmatpush2.bf16.msra.mxu0 %v577
  %724 = vmatprep.subr.bf16.mxu0 0
  %725 = vmatpush2.bf16.msra.mxu0 %v576
  %726 = vmatprep.subr.bf16.mxu0 0
  %727 = vmatpush2.bf16.msra.mxu0 %v575
  %728 = vmatprep.subr.bf16.mxu0 0
  %729 = vmatpush2.bf16.msra.mxu0 %v574
  %730 = vmatprep.subr.bf16.mxu0 0
  %731 = vmatpush2.bf16.msra.mxu0 %v573
  %732 = vmatprep.subr.bf16.mxu0 0
  %733 = vmatpush2.bf16.msra.mxu0 %v572
  %734 = vmatprep.subr.bf16.mxu0 0
  %735 = vmatpush2.bf16.msra.mxu0 %v571
  %736 = vmatprep.subr.bf16.mxu0 0
  %737 = vmatpush2.bf16.msra.mxu0 %v570
  %738 = vmatprep.mubr.bf16.mxu0 %v239
  %739 = vmatmul.mubr.bf16.gmra.mxu0 %v238
  %v740 = vpop.f32.mrf.mxu0
  %v741 = vadd.f32 0.0, %v740
  %v742 = vpop.f32.mrf.mxu0
  %v743 = vpop.f32.mrf.mxu0
  %v744 = vadd.f32 0.0, %v743
  %v745 = vpop.f32.mrf.mxu0
  %746 = vmatprep.mubr.bf16.mxu0 %v248
  %747 = vmatmul.mubr.bf16.gmra.mxu0 %v247
  %v748 = vpop.f32.mrf.mxu0
  %v749 = vadd.f32 0.0, %v748
  %v750 = vpop.f32.mrf.mxu0
  %v751 = vpop.f32.mrf.mxu0
  %v752 = vadd.f32 0.0, %v751
  %v753 = vpop.f32.mrf.mxu0
  %754 = vdwg.mxu0
  %755 = vmatprep.subr.bf16.mxu0 0
  %756 = vmatpush1.bf16.msra.mxu0 %v585
  %757 = vmatprep.subr.bf16.mxu0 0
  %758 = vmatpush1.bf16.msra.mxu0 %v584
  %759 = vmatprep.subr.bf16.mxu0 0
  %760 = vmatpush1.bf16.msra.mxu0 %v583
  %761 = vmatprep.subr.bf16.mxu0 0
  %762 = vmatpush1.bf16.msra.mxu0 %v582
  %763 = vmatprep.subr.bf16.mxu0 0
  %764 = vmatpush1.bf16.msra.mxu0 %v581
  %765 = vmatprep.subr.bf16.mxu0 0
  %766 = vmatpush1.bf16.msra.mxu0 %v580
  %767 = vmatprep.subr.bf16.mxu0 0
  %768 = vmatpush1.bf16.msra.mxu0 %v579
  %769 = vmatprep.subr.bf16.mxu0 0
  %770 = vmatpush1.bf16.msra.mxu0 %v578
  %771 = vmatprep.subr.bf16.mxu0 0
  %772 = vmatpush2.bf16.msra.mxu0 %v593
  %773 = vmatprep.subr.bf16.mxu0 0
  %774 = vmatpush2.bf16.msra.mxu0 %v592
  %775 = vmatprep.subr.bf16.mxu0 0
  %776 = vmatpush2.bf16.msra.mxu0 %v591
  %777 = vmatprep.subr.bf16.mxu0 0
  %778 = vmatpush2.bf16.msra.mxu0 %v590
  %779 = vmatprep.subr.bf16.mxu0 0
  %780 = vmatpush2.bf16.msra.mxu0 %v589
  %781 = vmatprep.subr.bf16.mxu0 0
  %782 = vmatpush2.bf16.msra.mxu0 %v588
  %783 = vmatprep.subr.bf16.mxu0 0
  %784 = vmatpush2.bf16.msra.mxu0 %v587
  %785 = vmatprep.subr.bf16.mxu0 0
  %786 = vmatpush2.bf16.msra.mxu0 %v586
  %787 = vmatprep.mubr.bf16.mxu0 %v241
  %788 = vmatmul.mubr.bf16.gmra.mxu0 %v240
  %v789 = vpop.f32.mrf.mxu0
  %v790 = vadd.f32 %v741, %v789
  %v791 = vpop.f32.mrf.mxu0
  %v792 = vpop.f32.mrf.mxu0
  %v793 = vadd.f32 %v744, %v792
  %v794 = vpop.f32.mrf.mxu0
  %795 = vmatprep.mubr.bf16.mxu0 %v250
  %796 = vmatmul.mubr.bf16.gmra.mxu0 %v249
  %v797 = vpop.f32.mrf.mxu0
  %v798 = vadd.f32 %v749, %v797
  %v799 = vpop.f32.mrf.mxu0
  %v800 = vpop.f32.mrf.mxu0
  %v801 = vadd.f32 %v752, %v800
  %v802 = vpop.f32.mrf.mxu0
  %803 = vdwg.mxu0
  %804 = vmatprep.subr.bf16.mxu0 0
  %805 = vmatpush1.bf16.msra.mxu0 %v601
  %806 = vmatprep.subr.bf16.mxu0 0
  %807 = vmatpush1.bf16.msra.mxu0 %v600
  %808 = vmatprep.subr.bf16.mxu0 0
  %809 = vmatpush1.bf16.msra.mxu0 %v599
  %810 = vmatprep.subr.bf16.mxu0 0
  %811 = vmatpush1.bf16.msra.mxu0 %v598
  %812 = vmatprep.subr.bf16.mxu0 0
  %813 = vmatpush1.bf16.msra.mxu0 %v597
  %814 = vmatprep.subr.bf16.mxu0 0
  %815 = vmatpush1.bf16.msra.mxu0 %v596
  %816 = vmatprep.subr.bf16.mxu0 0
  %817 = vmatpush1.bf16.msra.mxu0 %v595
  %818 = vmatprep.subr.bf16.mxu0 0
  %819 = vmatpush1.bf16.msra.mxu0 %v594
  %820 = vmatprep.subr.bf16.mxu0 0
  %821 = vmatpush2.bf16.msra.mxu0 %v609
  %822 = vmatprep.subr.bf16.mxu0 0
  %823 = vmatpush2.bf16.msra.mxu0 %v608
  %824 = vmatprep.subr.bf16.mxu0 0
  %825 = vmatpush2.bf16.msra.mxu0 %v607
  %826 = vmatprep.subr.bf16.mxu0 0
  %827 = vmatpush2.bf16.msra.mxu0 %v606
  %828 = vmatprep.subr.bf16.mxu0 0
  %829 = vmatpush2.bf16.msra.mxu0 %v605
  %830 = vmatprep.subr.bf16.mxu0 0
  %831 = vmatpush2.bf16.msra.mxu0 %v604
  %832 = vmatprep.subr.bf16.mxu0 0
  %833 = vmatpush2.bf16.msra.mxu0 %v603
  %834 = vmatprep.subr.bf16.mxu0 0
  %835 = vmatpush2.bf16.msra.mxu0 %v602
  %836 = vmatprep.mubr.bf16.mxu0 %v243
  %837 = vmatmul.mubr.bf16.gmra.mxu0 %v242
  %v838 = vpop.f32.mrf.mxu0
  %v839 = vadd.f32 %v790, %v838
  %v840 = vpop.f32.mrf.mxu0
  %v841 = vpop.f32.mrf.mxu0
  %v842 = vadd.f32 %v793, %v841
  %v843 = vpop.f32.mrf.mxu0
  %844 = vmatprep.mubr.bf16.mxu0 %v252
  %845 = vmatmul.mubr.bf16.gmra.mxu0 %v251
  %v846 = vpop.f32.mrf.mxu0
  %v847 = vadd.f32 %v798, %v846
  %v848 = vpop.f32.mrf.mxu0
  %v849 = vpop.f32.mrf.mxu0
  %v850 = vadd.f32 %v801, %v849
  %v851 = vpop.f32.mrf.mxu0
  %852 = vdwg.mxu0
  %853 = vmatprep.subr.bf16.mxu0 0
  %854 = vmatpush1.bf16.msra.mxu0 %v617
  %855 = vmatprep.subr.bf16.mxu0 0
  %856 = vmatpush1.bf16.msra.mxu0 %v616
  %857 = vmatprep.subr.bf16.mxu0 0
  %858 = vmatpush1.bf16.msra.mxu0 %v615
  %859 = vmatprep.subr.bf16.mxu0 0
  %860 = vmatpush1.bf16.msra.mxu0 %v614
  %861 = vmatprep.subr.bf16.mxu0 0
  %862 = vmatpush1.bf16.msra.mxu0 %v613
  %863 = vmatprep.subr.bf16.mxu0 0
  %864 = vmatpush1.bf16.msra.mxu0 %v612
  %865 = vmatprep.subr.bf16.mxu0 0
  %866 = vmatpush1.bf16.msra.mxu0 %v611
  %867 = vmatprep.subr.bf16.mxu0 0
  %868 = vmatpush1.bf16.msra.mxu0 %v610
  %869 = vmatprep.subr.bf16.mxu0 0
  %870 = vmatpush2.bf16.msra.mxu0 %v625
  %871 = vmatprep.subr.bf16.mxu0 0
  %872 = vmatpush2.bf16.msra.mxu0 %v624
  %873 = vmatprep.subr.bf16.mxu0 0
  %874 = vmatpush2.bf16.msra.mxu0 %v623
  %875 = vmatprep.subr.bf16.mxu0 0
  %876 = vmatpush2.bf16.msra.mxu0 %v622
  %877 = vmatprep.subr.bf16.mxu0 0
  %878 = vmatpush2.bf16.msra.mxu0 %v621
  %879 = vmatprep.subr.bf16.mxu0 0
  %880 = vmatpush2.bf16.msra.mxu0 %v620
  %881 = vmatprep.subr.bf16.mxu0 0
  %882 = vmatpush2.bf16.msra.mxu0 %v619
  %883 = vmatprep.subr.bf16.mxu0 0
  %884 = vmatpush2.bf16.msra.mxu0 %v618
  %885 = vmatprep.mubr.bf16.mxu0 %v245
  %886 = vmatmul.mubr.bf16.gmra.mxu0 %v244
  %v887 = vpop.f32.mrf.mxu0
  %v888 = vadd.f32 %v839, %v887
  %v889 = vpop.f32.mrf.mxu0
  %v890 = vpop.f32.mrf.mxu0
  %v891 = vadd.f32 %v842, %v890
  %v892 = vpop.f32.mrf.mxu0
  %893 = vmatprep.mubr.bf16.mxu0 %v254
  %894 = vmatmul.mubr.bf16.gmra.mxu0 %v253
  %v895 = vpop.f32.mrf.mxu0
  %v896 = vadd.f32 %v847, %v895
  %v897 = vpop.f32.mrf.mxu0
  %v898 = vpop.f32.mrf.mxu0
  %v899 = vadd.f32 %v850, %v898
  %v900 = vpop.f32.mrf.mxu0
  %901 = vdwg.mxu0
  %902 = vmatprep.subr.bf16.mxu0 0
  %903 = vmatpush1.bf16.msra.mxu0 %v633
  %904 = vmatprep.subr.bf16.mxu0 0
  %905 = vmatpush1.bf16.msra.mxu0 %v632
  %906 = vmatprep.subr.bf16.mxu0 0
  %907 = vmatpush1.bf16.msra.mxu0 %v631
  %908 = vmatprep.subr.bf16.mxu0 0
  %909 = vmatpush1.bf16.msra.mxu0 %v630
  %910 = vmatprep.subr.bf16.mxu0 0
  %911 = vmatpush1.bf16.msra.mxu0 %v629
  %912 = vmatprep.subr.bf16.mxu0 0
  %913 = vmatpush1.bf16.msra.mxu0 %v628
  %914 = vmatprep.subr.bf16.mxu0 0
  %915 = vmatpush1.bf16.msra.mxu0 %v627
  %916 = vmatprep.subr.bf16.mxu0 0
  %917 = vmatpush1.bf16.msra.mxu0 %v626
  %918 = vmatprep.subr.bf16.mxu0 0
  %919 = vmatpush2.bf16.msra.mxu0 0
  %920 = vmatprep.subr.bf16.mxu0 0
  %921 = vmatpush2.bf16.msra.mxu0 0
  %922 = vmatprep.subr.bf16.mxu0 0
  %923 = vmatpush2.bf16.msra.mxu0 0
  %924 = vmatprep.subr.bf16.mxu0 0
  %925 = vmatpush2.bf16.msra.mxu0 0
  %926 = vmatprep.subr.bf16.mxu0 0
  %927 = vmatpush2.bf16.msra.mxu0 0
  %928 = vmatprep.subr.bf16.mxu0 0
  %929 = vmatpush2.bf16.msra.mxu0 0
  %930 = vmatprep.subr.bf16.mxu0 0
  %931 = vmatpush2.bf16.msra.mxu0 0
  %932 = vmatprep.subr.bf16.mxu0 0
  %933 = vmatpush2.bf16.msra.mxu0 0
  %934 = vmatprep.mubr.bf16.mxu0 0
  %935 = vmatmul.mubr.bf16.gmra.mxu0 %v246
  %v936 = vpop.f32.mrf.mxu0
  %v937 = vadd.f32 %v888, %v936
  %v938 = vpop.f32.mrf.mxu0
  %v939 = vpop.f32.mrf.mxu0
  %v940 = vadd.f32 %v891, %v939
  %v941 = vpop.f32.mrf.mxu0
  %942 = vmatprep.mubr.bf16.mxu0 0
  %943 = vmatmul.mubr.bf16.gmra.mxu0 %v255
  %v944 = vpop.f32.mrf.mxu0
  %v945 = vadd.f32 %v896, %v944
  %v946 = vpop.f32.mrf.mxu0
  %v947 = vpop.f32.mrf.mxu0
  %v948 = vadd.f32 %v899, %v947
  %v949 = vpop.f32.mrf.mxu0
  %950 = vdwg.mxu0
  %v951 = vld [vmem:[%s2] sm:$0x1]
  %v953 = vlaneseq
  %v954 = vshrl.u32 %v953, 7
  %v955 = vsub.s32 0, %v954
  %v956 = vrot.slane %v951, %v955
  %v958 = vmul.f32 %v937, %v956
  %v959 = vmul.f32 %v940, %v956
  %v960 = vmul.f32 %v945, %v956
  %v961 = vmul.f32 %v948, %v956
  %v962 = vld [vmem:[%s3] sm:$0x1]
  %v964 = vlaneseq
  %v965 = vshrl.u32 %v964, 7
  %v966 = vsub.s32 0, %v965
  %v967 = vrot.slane %v962, %v966
  %v969 = vadd.f32 %v958, %v967
  %v970 = vadd.f32 %v959, %v967
  %v971 = vadd.f32 %v960, %v967
  %v972 = vadd.f32 %v961, %v967
  %v973 = vmax.f32 %v969, 0.0
  %v974 = vmax.f32 %v970, 0.0
  %v975 = vmax.f32 %v971, 0.0
  %v976 = vmax.f32 %v972, 0.0
  %v977 = vpack.c.bf16 %v974, %v973
  %v978 = vpack.c.bf16 %v976, %v975
  %v981 = vunpack.c.l.b16 %v977
  %v982 = vunpack.c.h.b16 %v977
  %v983 = vunpack.c.l.b16 %v978
  %v984 = vunpack.c.h.b16 %v978
  %v985 = vpack.c.b16 %v981, %v981
  %v986 = vpack.c.b16 %v982, %v982
  %v987 = vpack.c.b16 %v983, %v983
  %v988 = vpack.c.b16 %v984, %v984
  %993 = vst [vmem:[%s4] sm:$0xf] %v985
  %994 = vst [vmem:[%s4 + $0x4] sm:$0xf] %v986
  %995 = vst [vmem:[%s4 + $0x8] sm:$0xf] %v987
  %996 = vst [vmem:[%s4 + $0xc] sm:$0xf] %v988
  // Predicated region
  $region18: #{superpixel_tokenizer_forward.4} parent=0 // pred_check
    _
  $region19: #{superpixel_tokenizer_forward.4} parent=0 // pred_check_branch
    %998 = sbr.rel (0) target = $region21
  $region20: #{superpixel_tokenizer_forward.4} parent=0 // pred_region
    _
  $region21: #{superpixel_tokenizer_forward.4} parent=0 // pred_fallthru
    _
  // Predicated region
  $region22: #{superpixel_tokenizer_forward.4} parent=0 // pred_check
    _
  $region23: #{superpixel_tokenizer_forward.4} parent=0 // pred_check_branch
    %1000 = sbr.rel (0) target = $region25
  $region24: #{superpixel_tokenizer_forward.4} parent=0 // pred_region
    _
  $region25: #{superpixel_tokenizer_forward.4} parent=0 // pred_fallthru
    _

// kernel: sub.13
$region0: #{sub.13}
  %s0 = inlined_call_operand.vmem [shape: f32[2,3], index: 0, kind: input, shape index: {}]
  %s1 = inlined_call_operand.vmem [shape: f32[6], index: 1, kind: output, shape index: {}]
  $region1: #{sub.13} parent=0
    #allocation0 [shape = 'u8[4096]{0}', space=vmem, size = 0x1000, scoped, tag = 'scoped mem for output reshape']
    #allocation1 [shape = 'u8[4096]{0}', space=vmem, size = 0x1000, scoped, tag = 'scoped mem for input reshape']
    %s3 = sshll.u32 1, 2
    %s4 = ssub.s32 %s3, 1
    %v5 = vld [vmem:[%s0] sm:%s4]
    %6 = vst [vmem:[#allocation1] sm:%s4] %v5
    %v7 = vld [vmem:[#allocation1] sm:$0x1]
    %vm8 = vcmask 23552
    %9 = vst.msk [vmem:[#allocation0] sm:$0x1] %vm8, %v7
    %s10 = scalar_lea.vmem [#allocation1], 1
    %v11 = vld [vmem:[%s10] sm:$0x1]
    %12 = vrot.lane.b32.xlu0 %v11, 3
    %v13 = vpop.permute.xlu0 %12
    %vm14 = vcmask 48152
    %15 = vst.msk [vmem:[#allocation0] sm:$0x1] %vm14, %v13
    %s17 = sshll.u32 1, 1
    %s18 = ssub.s32 %s17, 1
    %v20 = vld [vmem:[#allocation0] sm:%s18]
    %s21 = sshll.u32 1, 1
    %s22 = ssub.s32 %s21, 1
    %23 = vst [vmem:[%s1] sm:%s22] %v20

// kernel: superpixel_tokenizer_forward.5
$region0: #{superpixel_tokenizer_forward.5}
  #allocation0 [shape = 'u32[]', space=smem, size = 0x4, offset = 0x4, fixed_abs, tag = 'smem constant byte address 0x4 - core index']
  #allocation1 [shape = 'u32[144,128]{1,0:T(1,128)}', space=vmem, size = 0x12000, scoped, tag = 'internal scratch']
  #allocation2 [shape = 'f32[16,128]{1,0:T(8,128)}', space=vmem, size = 0x2000, scoped, tag = 'scratch operand']
  %s0 = inlined_call_operand.vmem [shape: bf16[2,16,128], index: 0, kind: input, shape index: {}]
  %s1 = inlined_call_operand.vmem [shape: s32[2,1,16], index: 1, kind: input, shape index: {}]
  %s2 = inlined_call_operand.vmem [shape: f32[2,16,128], index: 2, kind: input, shape index: {}]
  %s3 = inlined_call_operand.vmem [shape: f32[2,16,128], index: 3, kind: output, shape index: {}]
  %s4 = sld [smem:[#allocation0]]
  $region53: #{superpixel_tokenizer_forward.5} parent=0
    _
  %s6 = ssub.s32 1, %s4
  %s7 = scalar_select 0, %s6, %s4
  loop: start=0, step=1, limit=4
  $region2: #{superpixel_tokenizer_forward.5} parent=0 // loop_pre_header
    _
  $region3: #{superpixel_tokenizer_forward.5} parent=0 // loop_header
    %s9 = sphi 0, %s13
    %p10 = scmp.ge.s32.totalorder %s9, 4
    %s16 = sphi 0, %s28
    %s17 = sphi 0, %s24
    %s18 = sphi 0, %s16
    %s19 = sphi 0, %s17
    %s20 = sphi 0, %s18
    %s21 = sphi 0, %s19
    %s33 = sphi 0, %s35
    %s36 = sphi 0, %s33
    %s37 = sphi 0, %s36
    %s53 = sphi 0, %s37
    %s61 = sphi 0, %s63
    %s64 = sphi 0, %s61
    %s65 = sphi 0, %s64
    %s81 = sphi 0, %s65
    %s87 = sphi 0, %s89
    %s90 = sphi 0, %s87
    %s91 = sphi 0, %s90
    %s107 = sphi 0, %s91
    %s113 = sphi 0, %s115
    %s116 = sphi 0, %s113
    %s117 = sphi 0, %s116
    %s133 = sphi 0, %s117
  $region4: #{superpixel_tokenizer_forward.5} parent=0 // loop_header_branch
    %12 = sbr.rel (%p10) target = $region8
  $region5: #{superpixel_tokenizer_forward.5} parent=0 // loop_body
    %s14 = ssub.s32 %s9, 1
    %s15 = ssub.s32 %s9, 2
    %s22 = sadd.s32 1, %s17
    %p23 = scmp.ge.s32.totalorder %s22, 1
    %s24 = scalar_select %p23, 0, %s22
    %s25 = sadd.s32 1, %s16
    %s26 = scalar_select %p23, %s25, %s16
    %p27 = scmp.ge.s32.totalorder %s26, 2
    %s28 = scalar_select %p27, 0, %s26
    %s29 = ssub.s32 %s16, %s28
    %s30 = ssub.s32 %s17, %s24
    %s31 = sor.u32 %s29, %s30
    %p32 = scmp.eq.s32.totalorder %s31, 0
    %s34 = sadd.s32 %s33, 1
    %s35 = scalar_select %p32, %s33, %s34
    %p38 = pneg %p32
    %p39 = scmp.eq.s32.totalorder %s9, 1
    %p40 = por %p38, %p39
    %p41 = scmp.ne.s32.totalorder %s33, %s36
    %p42 = scmp.eq.s32.totalorder %s9, 0
    %p43 = por %p41, %p42
    %p44 = scmp.ne.s32.totalorder %s33, %s36
    %p45 = scmp.eq.s32.totalorder %s14, 1
    %p46 = por %p44, %p45
    %p47 = scmp.ne.s32.totalorder %s36, %s37
    %p48 = scmp.eq.s32.totalorder %s14, 0
    %p49 = por %p47, %p48
    %p50 = scmp.ne.s32.totalorder %s36, %s37
    %p51 = scmp.eq.s32.totalorder %s15, 1
    %p52 = por %p50, %p51
    %p54 = scmp.ne.s32.totalorder %s37, %s53
    %p55 = scmp.eq.s32.totalorder %s15, 0
    %p56 = por %p54, %p55
    %s57 = ssub.s32 %s16, %s28
    %s58 = ssub.s32 %s17, %s24
    %s59 = sor.u32 %s57, %s58
    %p60 = scmp.eq.s32.totalorder %s59, 0
    %s62 = sadd.s32 %s61, 1
    %s63 = scalar_select %p60, %s61, %s62
    %p66 = pneg %p60
    %p67 = scmp.eq.s32.totalorder %s9, 1
    %p68 = por %p66, %p67
    %p69 = scmp.ne.s32.totalorder %s61, %s64
    %p70 = scmp.eq.s32.totalorder %s9, 0
    %p71 = por %p69, %p70
    %p72 = scmp.ne.s32.totalorder %s61, %s64
    %p73 = scmp.eq.s32.totalorder %s14, 1
    %p74 = por %p72, %p73
    %p75 = scmp.ne.s32.totalorder %s64, %s65
    %p76 = scmp.eq.s32.totalorder %s14, 0
    %p77 = por %p75, %p76
    %p78 = scmp.ne.s32.totalorder %s64, %s65
    %p79 = scmp.eq.s32.totalorder %s15, 1
    %p80 = por %p78, %p79
    %p82 = scmp.ne.s32.totalorder %s65, %s81
    %p83 = scmp.eq.s32.totalorder %s15, 0
    %p84 = por %p82, %p83
    %s85 = ssub.s32 %s16, %s28
    %p86 = scmp.eq.s32.totalorder %s85, 0
    %s88 = sadd.s32 %s87, 1
    %s89 = scalar_select %p86, %s87, %s88
    %p92 = pneg %p86
    %p93 = scmp.eq.s32.totalorder %s9, 1
    %p94 = por %p92, %p93
    %p95 = scmp.ne.s32.totalorder %s87, %s90
    %p96 = scmp.eq.s32.totalorder %s9, 0
    %p97 = por %p95, %p96
    %p98 = scmp.ne.s32.totalorder %s87, %s90
    %p99 = scmp.eq.s32.totalorder %s14, 1
    %p100 = por %p98, %p99
    %p101 = scmp.ne.s32.totalorder %s90, %s91
    %p102 = scmp.eq.s32.totalorder %s14, 0
    %p103 = por %p101, %p102
    %p104 = scmp.ne.s32.totalorder %s90, %s91
    %p105 = scmp.eq.s32.totalorder %s15, 1
    %p106 = por %p104, %p105
    %p108 = scmp.ne.s32.totalorder %s91, %s107
    %p109 = scmp.eq.s32.totalorder %s15, 0
    %p110 = por %p108, %p109
    %s111 = ssub.s32 %s16, %s28
    %p112 = scmp.eq.s32.totalorder %s111, 0
    %s114 = sadd.s32 %s113, 1
    %s115 = scalar_select %p112, %s113, %s114
    %p118 = pneg %p112
    %p119 = scmp.eq.s32.totalorder %s9, 1
    %p120 = por %p118, %p119
    %p121 = scmp.ne.s32.totalorder %s113, %s116
    %p122 = scmp.eq.s32.totalorder %s9, 0
    %p123 = por %p121, %p122
    %p124 = scmp.ne.s32.totalorder %s113, %s116
    %p125 = scmp.eq.s32.totalorder %s14, 1
    %p126 = por %p124, %p125
    %p127 = scmp.ne.s32.totalorder %s116, %s117
    %p128 = scmp.eq.s32.totalorder %s14, 0
    %p129 = por %p127, %p128
    %p130 = scmp.ne.s32.totalorder %s116, %s117
    %p131 = scmp.eq.s32.totalorder %s15, 1
    %p132 = por %p130, %p131
    %p134 = scmp.ne.s32.totalorder %s117, %s133
    %p135 = scmp.eq.s32.totalorder %s15, 0
    %p136 = por %p134, %p135
    %p137 = scmp.le.s32.totalorder 1, %s9
    %p138 = scmp.lt.s32.totalorder %s9, 3
    %p139 = pnand %p137, %p138
    %p140 = pneg %p139
    // Predicated region
    $region9: #{superpixel_tokenizer_forward.5} parent=5 // pred_check
      _
    $region10: #{superpixel_tokenizer_forward.5} parent=5 // pred_check_branch
      %142 = sbr.rel (%p139) target = $region12
    $region11: #{superpixel_tokenizer_forward.5} parent=5 // pred_region
      %s143 = ssub.s32 %s9, 1
    $region12: #{superpixel_tokenizer_forward.5} parent=5 // pred_fallthru
      _
    %p144 = scmp.lt.s32.totalorder %s9, 2
    // Predicated region
    $region13: #{superpixel_tokenizer_forward.5} parent=5 // pred_check
      %p145 = pneg %p144
    $region14: #{superpixel_tokenizer_forward.5} parent=5 // pred_check_branch
      %147 = sbr.rel (%p145) target = $region16
    $region15: #{superpixel_tokenizer_forward.5} parent=5 // pred_region
      // Predicated region
      $region17: #{superpixel_tokenizer_forward.5} parent=15 // pred_check
        %p148 = pneg %p43
      $region18: #{superpixel_tokenizer_forward.5} parent=15 // pred_check_branch
        %150 = sbr.rel (%p148) target = $region20
      $region19: #{superpixel_tokenizer_forward.5} parent=15 // pred_region
        %s151 = smul.u32 2, %s17
        %p152 = scmp.lt.s32.totalorder %s16, 1
        %s153 = scalar_select %p152, %s16, 1
        %p154 = scmp.lt.s32.totalorder %s151, 1
        %s155 = scalar_select %p154, %s151, 1
        %s156 = smul.addr %s153, 2
        %s157 = sadd.s32 %s155, %s156
        %s158 = smul.addr %s157, 4
        %s159 = scalar_lea.vmem %s0, %s158
        %s160 = smul.u32 2, %s17
      $region20: #{superpixel_tokenizer_forward.5} parent=15 // pred_fallthru
        _
      // Predicated region
      $region21: #{superpixel_tokenizer_forward.5} parent=15 // pred_check
        %p161 = pneg %p71
      $region22: #{superpixel_tokenizer_forward.5} parent=15 // pred_check_branch
        %163 = sbr.rel (%p161) target = $region24
      $region23: #{superpixel_tokenizer_forward.5} parent=15 // pred_region
        %p164 = scmp.lt.s32.totalorder %s16, 1
        %s165 = scalar_select %p164, %s16, 1
        %p166 = scmp.lt.s32.totalorder %s17, 0
        %s167 = scalar_select %p166, %s17, 0
        %s168 = sadd.s32 %s167, %s165
        %s169 = scalar_lea.vmem %s1, %s168
      $region24: #{superpixel_tokenizer_forward.5} parent=15 // pred_fallthru
        _
      // Predicated region
      $region25: #{superpixel_tokenizer_forward.5} parent=15 // pred_check
        %p170 = pneg %p97
      $region26: #{superpixel_tokenizer_forward.5} parent=15 // pred_check_branch
        %172 = sbr.rel (%p170) target = $region28
      $region27: #{superpixel_tokenizer_forward.5} parent=15 // pred_region
        %p173 = scmp.lt.s32.totalorder %s16, 1
        %s174 = scalar_select %p173, %s16, 1
        %s175 = smul.addr %s174, 2
        %s176 = smul.addr %s175, 8
        %s177 = scalar_lea.vmem %s2, %s176
      $region28: #{superpixel_tokenizer_forward.5} parent=15 // pred_fallthru
        _
    $region16: #{superpixel_tokenizer_forward.5} parent=5 // pred_fallthru
      _
    %p178 = scmp.le.s32.totalorder 1, %s9
    %p179 = scmp.lt.s32.totalorder %s9, 3
    %p180 = pnand %p178, %p179
    %p181 = pneg %p180
    // Predicated region
    $region29: #{superpixel_tokenizer_forward.5} parent=5 // pred_check
      _
    $region30: #{superpixel_tokenizer_forward.5} parent=5 // pred_check_branch
      %183 = sbr.rel (%p180) target = $region32
    $region31: #{superpixel_tokenizer_forward.5} parent=5 // pred_region
      %s184 = ssub.s32 %s9, 1
      %s185 = smul.u32 2, %s19
      %p186 = scmp.lt.s32.totalorder %s18, 1
      %s187 = scalar_select %p186, %s18, 1
      %p188 = scmp.lt.s32.totalorder %s185, 1
      %s189 = scalar_select %p188, %s185, 1
      %s190 = smul.addr %s187, 2
      %s191 = sadd.s32 %s189, %s190
      %s192 = smul.addr %s191, 4
      %s193 = scalar_lea.vmem %s0, %s192
      %p194 = pneg %p49
      %p195 = pneg %p46
      %p196 = scmp.lt.s32.totalorder %s18, 1
      %s197 = scalar_select %p196, %s18, 1
      %p198 = scmp.lt.s32.totalorder %s19, 0
      %s199 = scalar_select %p198, %s19, 0
      %s200 = sadd.s32 %s199, %s197
      %s201 = scalar_lea.vmem %s1, %s200
      %p202 = pneg %p77
      %p203 = pneg %p74
      %p204 = scmp.lt.s32.totalorder %s18, 1
      %s205 = scalar_select %p204, %s18, 1
      %s206 = smul.addr %s205, 2
      %s207 = smul.addr %s206, 8
      %s208 = scalar_lea.vmem %s2, %s207
      %p209 = pneg %p103
      %p210 = pneg %p100
      %p211 = pneg %p129
      %p212 = pneg %p126
      %p213 = scmp.lt.s32.totalorder %s18, 1
      %s214 = scalar_select %p213, %s18, 1
      %s215 = smul.addr %s214, 2
      %s216 = smul.addr %s215, 8
      %s217 = scalar_lea.vmem %s3, %s216
      %s218 = smul.u32 2, %s19
      %p219 = scmp.lt.s32.totalorder %s18, 1
      %s220 = scalar_select %p219, %s18, 1
      %p221 = scmp.lt.s32.totalorder %s218, 1
      %s222 = scalar_select %p221, %s218, 1
      %s223 = smul.addr %s220, 2
      %s224 = sadd.s32 %s222, %s223
      %s225 = smul.addr %s224, 4
      %s226 = scalar_lea.vmem %s0, %s225
      %s227 = smul.u32 2, %s19
      %p228 = scmp.lt.s32.totalorder %s18, 1
      %s229 = scalar_select %p228, %s18, 1
      %p230 = scmp.lt.s32.totalorder %s19, 0
      %s231 = scalar_select %p230, %s19, 0
      %s232 = sadd.s32 %s231, %s229
      %s233 = scalar_lea.vmem %s1, %s232
      %p234 = scmp.lt.s32.totalorder %s18, 1
      %s235 = scalar_select %p234, %s18, 1
      %s236 = smul.addr %s235, 2
      %s237 = smul.addr %s236, 8
      %s238 = scalar_lea.vmem %s2, %s237
      %p239 = scmp.lt.s32.totalorder %s18, 1
      %s240 = scalar_select %p239, %s18, 1
      %s241 = smul.addr %s240, 2
      %s242 = smul.addr %s241, 8
      %s243 = scalar_lea.vmem %s3, %s242
      %p245 = scmp.eq.s32.totalorder %s19, 0
      // Predicated region
      $region33: #{superpixel_tokenizer_forward.5} parent=31 // pred_check
        %p246 = pneg %p245
      $region34: #{superpixel_tokenizer_forward.5} parent=31 // pred_check_branch
        %248 = sbr.rel (%p246) target = $region36
      $region35: #{superpixel_tokenizer_forward.5} parent=31 // pred_region
        %249 = vst [vmem:[#allocation2] sm:$0xff] 0.0
        %250 = vst [vmem:[#allocation2 + $0x8] sm:$0xff] 0.0
      $region36: #{superpixel_tokenizer_forward.5} parent=31 // pred_fallthru
        _
      %v251 = vld [vmem:[%s226] sm:$0xf]
      %v252 = vld [vmem:[%s226 + $0x4] sm:$0xf]
      %v253 = vld [vmem:[%s233] sm:$0x1]
      %v254 = vlaneseq
      %v255 = vshrl.u32 %v254, 7
      %v256 = vadd.s32 %v255, 8
      %v257 = vlaneseq
      %v258 = vshrl.u32 %v257, 7
      %v259 = vsub.s32 0, %v258
      %v260 = vrot.slane %v253, %v259
      %vm261 = vcmp.eq.s32.totalorder %v255, %v260
      %vm262 = vcmp.eq.s32.totalorder %v256, %v260
      %v263 = vsel %vm261, 1, 0
      %v264 = vsel %vm262, 1, 0
      %v265 = vcvt.s32.f32 %v263
      %v266 = vcvt.s32.f32 %v264
      %v267 = vpack.c.bf16 %v266, %v265
      %v268 = vld [vmem:[#allocation2] sm:$0xff]
      %v269 = vld [vmem:[#allocation2 + $0x8] sm:$0xff]
      %v272 = vunpack.c.l.b16 %v251
      %v273 = vunpack.c.l.b16 %v252
      %v274 = vpack.c.b16 %v273, %v272
      %vm276 = vcmask 130048
      %v278 = vsel %vm276, %v267, 0
      %280 = vmatprep.subr.bf16.mxu0 0
      %281 = vmatpush1.bf16.msra.mxu0 0
      %282 = vmatprep.subr.bf16.mxu0 0
      %283 = vmatpush1.bf16.msra.mxu0 0
      %284 = vmatprep.subr.bf16.mxu0 0
      %285 = vmatpush1.bf16.msra.mxu0 0
      %286 = vmatprep.subr.bf16.mxu0 0
      %287 = vmatpush1.bf16.msra.mxu0 0
      %288 = vmatprep.subr.bf16.mxu0 0
      %289 = vmatpush1.bf16.msra.mxu0 0
      %290 = vmatprep.subr.bf16.mxu0 0
      %291 = vmatpush1.bf16.msra.mxu0 0
      %292 = vmatprep.subr.bf16.mxu0 0
      %293 = vmatpush1.bf16.msra.mxu0 0
      %294 = vmatprep.subr.bf16.mxu0 0
      %295 = vmatpush1.bf16.msra.mxu0 %v274
      %296 = vmatprep.subr.bf16.mxu0 0
      %297 = vmatpush2.bf16.msra.mxu0 0
      %298 = vmatprep.subr.bf16.mxu0 0
      %299 = vmatpush2.bf16.msra.mxu0 0
      %300 = vmatprep.subr.bf16.mxu0 0
      %301 = vmatpush2.bf16.msra.mxu0 0
      %302 = vmatprep.subr.bf16.mxu0 0
      %303 = vmatpush2.bf16.msra.mxu0 0
      %304 = vmatprep.subr.bf16.mxu0 0
      %305 = vmatpush2.bf16.msra.mxu0 0
      %306 = vmatprep.subr.bf16.mxu0 0
      %307 = vmatpush2.bf16.msra.mxu0 0
      %308 = vmatprep.subr.bf16.mxu0 0
      %309 = vmatpush2.bf16.msra.mxu0 0
      %310 = vmatprep.subr.bf16.mxu0 0
      %311 = vmatpush2.bf16.msra.mxu0 0
      %312 = vmatprep.mubr.bf16.mxu0 0
      %313 = vmatmul.mubr.bf16.gmra.mxu0 %v278
      %v314 = vpop.f32.mrf.mxu0
      %v315 = vadd.f32 0.0, %v314
      %v316 = vpop.f32.mrf.mxu0
      %v317 = vpop.f32.mrf.mxu0
      %v318 = vadd.f32 0.0, %v317
      %v319 = vpop.f32.mrf.mxu0
      %320 = vdwg.mxu0
      %v321 = vadd.f32 %v268, %v315
      %v322 = vadd.f32 %v269, %v318
      %323 = vst [vmem:[#allocation2] sm:$0xff] %v321
      %324 = vst [vmem:[#allocation2 + $0x8] sm:$0xff] %v322
      // Predicated region
      $region37: #{superpixel_tokenizer_forward.5} parent=31 // pred_check
        %p325 = pneg %p245
      $region38: #{superpixel_tokenizer_forward.5} parent=31 // pred_check_branch
        %327 = sbr.rel (%p325) target = $region40
      $region39: #{superpixel_tokenizer_forward.5} parent=31 // pred_region
        %v328 = vld [vmem:[#allocation2] sm:$0xff]
        %v329 = vld [vmem:[#allocation2 + $0x8] sm:$0xff]
        %v330 = vmax.f32 %v328, 1.0
        %v331 = vmax.f32 %v329, 1.0
        %v332 = vrcp.pop %v330
        %v333 = vrcp.pop %v331
        %335 = vset.pattern.permute.xlu0 32
        %336 = vperm.xlu0 %335, %v332
        %v337 = vpop.permute.xlu0 %336
        %340 = vset.pattern.permute.xlu0 32
        %341 = vperm.xlu0 %340, %v333
        %v342 = vpop.permute.xlu0 %341
        %v344 = vmul.f32 %v328, %v337
        %v345 = vmul.f32 %v329, %v342
        %v346 = vld [vmem:[%s238] sm:$0xff]
        %v347 = vld [vmem:[%s238 + $0x8] sm:$0xff]
        %v348 = vadd.f32 %v344, %v346
        %v349 = vadd.f32 %v345, %v347
        %350 = vst [vmem:[%s243] sm:$0xff] %v348
        %351 = vst [vmem:[%s243 + $0x8] sm:$0xff] %v349
      $region40: #{superpixel_tokenizer_forward.5} parent=31 // pred_fallthru
        _
      %p352 = scmp.lt.s32.totalorder %s18, 1
      %s353 = scalar_select %p352, %s18, 1
      %s354 = smul.addr %s353, 2
      %s355 = smul.addr %s354, 8
      %s356 = scalar_lea.vmem %s3, %s355
      // Predicated region
      $region41: #{superpixel_tokenizer_forward.5} parent=31 // pred_check
        %p357 = pneg %p126
      $region42: #{superpixel_tokenizer_forward.5} parent=31 // pred_check_branch
        %359 = sbr.rel (%p357) target = $region44
      $region43: #{superpixel_tokenizer_forward.5} parent=31 // pred_region
        _
      $region44: #{superpixel_tokenizer_forward.5} parent=31 // pred_fallthru
        _
    $region32: #{superpixel_tokenizer_forward.5} parent=5 // pred_fallthru
      _
    %p360 = scmp.le.s32.totalorder 2, %s9
    // Predicated region
    $region45: #{superpixel_tokenizer_forward.5} parent=5 // pred_check
      %p361 = pneg %p360
    $region46: #{superpixel_tokenizer_forward.5} parent=5 // pred_check_branch
      %363 = sbr.rel (%p361) target = $region48
    $region47: #{superpixel_tokenizer_forward.5} parent=5 // pred_region
      %s364 = ssub.s32 %s9, 2
      // Predicated region
      $region49: #{superpixel_tokenizer_forward.5} parent=47 // pred_check
        %p365 = pneg %p132
      $region50: #{superpixel_tokenizer_forward.5} parent=47 // pred_check_branch
        %367 = sbr.rel (%p365) target = $region52
      $region51: #{superpixel_tokenizer_forward.5} parent=47 // pred_region
        %p368 = scmp.lt.s32.totalorder %s20, 1
        %s369 = scalar_select %p368, %s20, 1
        %s370 = smul.addr %s369, 2
        %s371 = smul.addr %s370, 8
        %s372 = scalar_lea.vmem %s3, %s371
      $region52: #{superpixel_tokenizer_forward.5} parent=47 // pred_fallthru
        _
    $region48: #{superpixel_tokenizer_forward.5} parent=5 // pred_fallthru
      _
  $region6: #{superpixel_tokenizer_forward.5} parent=0 // loop_footer
    %s13 = sadd.s32 1, %s9
  $region7: #{superpixel_tokenizer_forward.5} parent=0 // loop_footer_branch
    %8 = sbr.rel target = $region3
  $region8: #{superpixel_tokenizer_forward.5} parent=0 // loop_exit
    _

</llo_original>
